<compile_context>
chip_gen: v6e
topology: v6e:2x2x1
jax: 0.10.0
libtpu: 0.0.40
codegen_flags: <defaults>
</compile_context>

<pallas_src>
import math

import jax
import jax.numpy as jnp
from jax import lax
from jax.experimental import pallas as pl
from jax.experimental.pallas import tpu as pltpu


NUM_GROUPS = 32
EPS = 1e-6


def _spatial_self_attention_kernel(x_ref, gmat_ref, wqkv_ref, bqkv_ref,
                                   wo_ref, bo_ref, o_ref):
    # x_ref:    (1, c, hw)  channel-first flattened input for one batch element
    # gmat_ref: (c, c)      group-mixing matrix, pre-divided by (hw*group_size)
    # wqkv_ref: (c, 3c)     fused q/k/v weight (transposed, gamma & scale folded), bf16
    # bqkv_ref: (1, 3c)     fused q/k/v bias (beta & scale folded), f32
    # wo_ref:   (c, c)      output-projection weight (transposed), bf16
    # bo_ref:   (1, c)      f32
    # o_ref:    (1, c, hw)
    x_cf = x_ref[0].astype(jnp.float32)                     # (c, hw)
    x = x_cf.T                                              # (hw, c) in-VMEM transpose
    c = x.shape[1]

    # ---- GroupNorm(32, c, eps=1e-6): per-channel moments + group mixing -----
    cs = jnp.sum(x, axis=0, keepdims=True)                  # (1, c) sum x
    css = jnp.sum(x * x, axis=0, keepdims=True)             # (1, c) sum x^2
    stats = jnp.concatenate([cs, css], axis=0)              # (2, c)
    gstats = jnp.dot(stats, gmat_ref[...],
                     preferred_element_type=jnp.float32)    # (2, c)
    mean = gstats[0:1]
    var = jnp.maximum(gstats[1:2] - mean * mean, 0.0)       # clamp: cancellation guard
    inv = lax.rsqrt(var + jnp.float32(EPS))
    a = inv
    b_off = -mean * inv
    xc = (x * a + b_off).astype(jnp.bfloat16)               # (hw, c); gamma/beta folded into wqkv

    # ---- Fused q/k/v projection (single bf16 MXU matmul, f32 accumulate) ----
    qkv = jnp.dot(xc, wqkv_ref[...],
                  preferred_element_type=jnp.float32) + bqkv_ref[...]
    q = qkv[:, :c].astype(jnp.bfloat16)                     # 1/sqrt(c) already folded in
    k = qkv[:, c:2 * c].astype(jnp.bfloat16)
    v = qkv[:, 2 * c:].astype(jnp.bfloat16)

    # ---- Attention over the hw spatial positions ----------------------------
    # contract the channel axis of both operands: no explicit k.T transpose.
    s = lax.dot_general(q, k, (((1,), (1,)), ((), ())),
                        preferred_element_type=jnp.float32)           # (hw, hw)
    s = s - jnp.max(s, axis=-1, keepdims=True)
    p = jnp.exp(s)
    l = jnp.sum(p, axis=-1, keepdims=True)                             # (hw, 1)
    attn_out = jnp.dot(p.astype(jnp.bfloat16), v,
                       preferred_element_type=jnp.float32)             # (hw, c)
    attn_out = attn_out * pl.reciprocal(l, approx=True)                # normalize after PV

    # ---- Output 1x1 conv + residual (residual kept in f32) ------------------
    proj = jnp.dot(attn_out.astype(jnp.bfloat16), wo_ref[...],
                   preferred_element_type=jnp.float32) + bo_ref[...]
    out = x + proj                                                     # (hw, c)
    o_ref[0] = out.T.astype(o_ref.dtype)                               # (c, hw)


def spatial_self_attention(x, gamma, beta, wq, bq, wk, bk, wv, bv, wo, bo):
    """SpatialSelfAttention forward.

    x: (b, c, h, w); conv weights are the squeezed PyTorch 1x1-conv kernels,
    i.e. shape (out_c, in_c); biases (c,); gamma/beta (c,). Returns (b,c,h,w).
    """
    b, c, h, w = x.shape
    assert c % NUM_GROUPS == 0, "GroupNorm(32) requires channels % 32 == 0"
    hw = h * w
    group_size = c // NUM_GROUPS

    # --- one-time parameter glue (in real use hoist to module init) ----------
    # TODO(synk): precompute the fused/transposed/folded weights at init.
    scale = jnp.float32(1.0 / math.sqrt(c))
    w_cat = jnp.concatenate([wq.T * scale, wk.T, wv.T], axis=1)        # (c, 3c) f32
    b_cat = jnp.concatenate([bq * scale, bk, bv])                      # (3c,)  f32
    # fold GroupNorm affine: h_ = xc*gamma + beta  =>  h_ @ W = xc @ (gamma*W) + beta @ W
    bqkv = (beta @ w_cat + b_cat).reshape(1, 3 * c).astype(jnp.float32)
    wqkv = (gamma[:, None] * w_cat).astype(jnp.bfloat16)               # (c, 3c) bf16
    wo_t = wo.T.astype(jnp.bfloat16)                                   # (c, c)  bf16
    bo_r = bo.reshape(1, c).astype(jnp.float32)

    grp = jnp.arange(c, dtype=jnp.int32) // group_size
    gmat = (grp[:, None] == grp[None, :]).astype(jnp.float32)
    gmat = gmat / jnp.float32(hw * group_size)                         # (c, c)

    # channel-first, spatially-flattened layout: a free reshape, no HBM transpose.
    x_cf = x.reshape(b, c, hw)

    # --- VMEM budget: actual footprint + headroom, capped for v7x (64 MiB) ---
    f32b, bf16b = 4, 2
    blk = c * hw * f32b                                                # one x / out block
    weights = c * c * f32b + c * 3 * c * bf16b + c * c * bf16b + 4 * c * f32b
    interm = (4 * hw * c * f32b          # x, xc, attn_out, out
              + hw * 3 * c * f32b        # qkv
              + 4 * hw * c * bf16b       # bf16 copies of xc, q/k/v, p-cast staging
              + 2 * hw * hw * f32b)      # scores + exp
    vmem_bytes = 2 * (2 * blk + 2 * blk + weights) + interm
    vmem_bytes = int(min(max(vmem_bytes, 8 * 1024 * 1024), 48 * 1024 * 1024))

    out = pl.pallas_call(
        _spatial_self_attention_kernel,
        out_shape=jax.ShapeDtypeStruct((b, c, hw), x.dtype),
        grid_spec=pltpu.PrefetchScalarGridSpec(
            num_scalar_prefetch=0,
            grid=(b,),
            in_specs=[
                pl.BlockSpec((1, c, hw), lambda i: (i, 0, 0)),   # x
                pl.BlockSpec((c, c), lambda i: (0, 0)),          # group matrix
                pl.BlockSpec((c, 3 * c), lambda i: (0, 0)),      # wqkv (bf16)
                pl.BlockSpec((1, 3 * c), lambda i: (0, 0)),      # bqkv
                pl.BlockSpec((c, c), lambda i: (0, 0)),          # wo (bf16)
                pl.BlockSpec((1, c), lambda i: (0, 0)),          # bo
            ],
            out_specs=pl.BlockSpec((1, c, hw), lambda i: (i, 0, 0)),
        ),
        compiler_params=pltpu.CompilerParams(
            dimension_semantics=("parallel",),
            vmem_limit_bytes=vmem_bytes),
    )(x_cf, gmat, wqkv, bqkv, wo_t, bo_r)

    return out.reshape(b, c, h, w)


def _reference(x, gamma, beta, wq, bq, wk, bk, wv, bv, wo, bo):
    """Pure-JAX reference mirroring the PyTorch forward."""
    b, c, h, w = x.shape
    xg = x.reshape(b, NUM_GROUPS, c // NUM_GROUPS, h, w)
    mean = xg.mean(axis=(2, 3, 4), keepdims=True)
    var = xg.var(axis=(2, 3, 4), keepdims=True)
    xn = (xg - mean) / jnp.sqrt(var + EPS)
    xn = xn.reshape(b, c, h, w) * gamma[None, :, None, None] \
        + beta[None, :, None, None]

    def conv1x1(t, wgt, bia):
        return jnp.einsum('bchw,oc->bohw', t, wgt,
                          precision='highest') + bia[None, :, None, None]

    q = conv1x1(xn, wq, bq)
    k = conv1x1(xn, wk, bk)
    v = conv1x1(xn, wv, bv)
    hw = h * w
    qf = q.reshape(b, c, hw).transpose(0, 2, 1)            # (b, hw, c)
    kf = k.reshape(b, c, hw)                               # (b, c, hw)
    attn = jnp.einsum('bic,bcj->bij', qf, kf, precision='highest') * (c ** -0.5)
    attn = jax.nn.softmax(attn, axis=2)
    vf = v.reshape(b, c, hw)                               # (b, c, hw)
    out = jnp.einsum('bcj,bij->bci', vf, attn, precision='highest')
    out = out.reshape(b, c, h, w)
    out = conv1x1(out, wo, bo)
    return x + out


if __name__ == "__main__":
    # channels must be a multiple of 32 (GroupNorm); 128 keeps the lane axis
    # dense and the fused-qkv slices 128-aligned.
    batch, channels, height, width = 2, 128, 16, 16

    key = jax.random.PRNGKey(0)
    keys = jax.random.split(key, 11)

    bound = 1.0 / math.sqrt(channels)

    def u(k, shape):
        return jax.random.uniform(k, shape, minval=-bound, maxval=bound,
                                  dtype=jnp.float32)

    x = jax.random.normal(keys[0], (batch, channels, height, width),
                          dtype=jnp.float32)
    gamma = 1.0 + 0.1 * jax.random.normal(keys[1], (channels,), dtype=jnp.float32)
    beta = 0.1 * jax.random.normal(keys[2], (channels,), dtype=jnp.float32)
    wq = u(keys[3], (channels, channels)); bq = u(keys[4], (channels,))
    wk = u(keys[5], (channels, channels)); bk = u(keys[6], (channels,))
    wv = u(keys[7], (channels, channels)); bv = u(keys[8], (channels,))
    wo = u(keys[9], (channels, channels)); bo = u(keys[10], (channels,))

    out = spatial_self_attention(x, gamma, beta, wq, bq, wk, bk, wv, bv, wo, bo)
    out = jax.block_until_ready(out)

    ref = _reference(x, gamma, beta, wq, bq, wk, bk, wv, bv, wo, bo)
    assert out.shape == x.shape
    max_err = float(jnp.max(jnp.abs(out - ref)))
    # tolerance covers bf16 MXU operands (f32 accumulation / residual kept in f32)
    assert jnp.allclose(out, ref, atol=5e-3, rtol=5e-3), \
        f"mismatch vs reference, max_err={max_err}"

    print("KERNEL_OK")
</pallas_src>

<mosaic_0001>
module attributes {stable_mosaic.version = 11 : i64} {
  func.func @_spatial_self_attention_kernel(%arg0: i32, %arg1: memref<1x128x256xf32, #tpu.memory_space<vmem>>, %arg2: memref<128x128xf32, #tpu.memory_space<vmem>>, %arg3: memref<128x384xbf16, #tpu.memory_space<vmem>>, %arg4: memref<1x384xf32, #tpu.memory_space<vmem>>, %arg5: memref<128x128xbf16, #tpu.memory_space<vmem>>, %arg6: memref<1x128xf32, #tpu.memory_space<vmem>>, %arg7: memref<1x128x256xf32, #tpu.memory_space<vmem>>) attributes {dimension_semantics = [#tpu.dimension_semantics<parallel>], iteration_bounds = array<i64: 2>, scalar_prefetch = 0 : i64, scratch_operands = 0 : i64, tpu.core_type = #tpu.core_type<tc>, window_params = [{transform_indices = @transform_0, window_bounds = array<i64: 1, 128, 256>}, {pipeline_mode = #tpu.pipeline_mode<synchronous>, transform_indices = @transform_1, window_bounds = array<i64: 128, 128>}, {pipeline_mode = #tpu.pipeline_mode<synchronous>, transform_indices = @transform_2, window_bounds = array<i64: 128, 384>}, {pipeline_mode = #tpu.pipeline_mode<synchronous>, transform_indices = @transform_3, window_bounds = array<i64: 1, 384>}, {pipeline_mode = #tpu.pipeline_mode<synchronous>, transform_indices = @transform_4, window_bounds = array<i64: 128, 128>}, {pipeline_mode = #tpu.pipeline_mode<synchronous>, transform_indices = @transform_5, window_bounds = array<i64: 1, 128>}, {transform_indices = @transform_6, window_bounds = array<i64: 1, 128, 256>}]} {
    %c0 = arith.constant 0 : index
    %c0_0 = arith.constant 0 : index
    %c0_1 = arith.constant 0 : index
    %0 = vector.load %arg1[%c0, %c0_0, %c0_1] : memref<1x128x256xf32, #tpu.memory_space<vmem>>, vector<1x128x256xf32>
    %1 = vector.shape_cast %0 : vector<1x128x256xf32> to vector<128x256xf32>
    %2 = tpu.transpose %1, [1, 0] : vector<128x256xf32> -> vector<256x128xf32>
    %cst = arith.constant dense<0.000000e+00> : vector<128xf32>
    %3 = vector.multi_reduction <add>, %2, %cst [0] : vector<256x128xf32> to vector<128xf32>
    %4 = vector.shape_cast %3 : vector<128xf32> to vector<1x128xf32>
    %5 = arith.mulf %2, %2 : vector<256x128xf32>
    %cst_2 = arith.constant dense<0.000000e+00> : vector<128xf32>
    %6 = vector.multi_reduction <add>, %5, %cst_2 [0] : vector<256x128xf32> to vector<128xf32>
    %7 = vector.shape_cast %6 : vector<128xf32> to vector<1x128xf32>
    %8 = tpu.concatenate %4, %7 in 0 : vector<1x128xf32>, vector<1x128xf32> -> vector<2x128xf32>
    %c0_3 = arith.constant 0 : index
    %c0_4 = arith.constant 0 : index
    %9 = vector.load %arg2[%c0_3, %c0_4] : memref<128x128xf32, #tpu.memory_space<vmem>>, vector<128x128xf32>
    %cst_5 = arith.constant dense<0.000000e+00> : vector<2x128xf32>
    %10 = tpu.matmul %8, %9, %cst_5 {dimension_numbers = #tpu.dot_dimension_numbers<[1], [0], [0], [1], [0, 0, 1, 1], [], []>} : vector<2x128xf32>, vector<128x128xf32>, vector<2x128xf32> -> vector<2x128xf32>
    %11 = vector.extract_strided_slice %10 {offsets = [0, 0], sizes = [1, 128], strides = [1, 1]} : vector<2x128xf32> to vector<1x128xf32>
    %12 = vector.extract_strided_slice %10 {offsets = [1, 0], sizes = [1, 128], strides = [1, 1]} : vector<2x128xf32> to vector<1x128xf32>
    %13 = arith.mulf %11, %11 : vector<1x128xf32>
    %14 = arith.subf %12, %13 : vector<1x128xf32>
    %cst_6 = arith.constant 0.000000e+00 : f32
    %15 = vector.broadcast %cst_6 : f32 to vector<1x128xf32>
    %16 = arith.maximumf %14, %15 : vector<1x128xf32>
    %cst_7 = arith.constant 9.99999997E-7 : f32
    %17 = vector.broadcast %cst_7 : f32 to vector<1x128xf32>
    %18 = arith.addf %16, %17 : vector<1x128xf32>
    %19 = math.rsqrt %18 : vector<1x128xf32>
    %cst_8 = arith.constant 0.000000e+00 : f32
    %20 = vector.broadcast %cst_8 : f32 to vector<1x128xf32>
    %21 = arith.subf %20, %11 : vector<1x128xf32>
    %22 = arith.mulf %21, %19 : vector<1x128xf32>
    %23 = vector.broadcast %19 : vector<1x128xf32> to vector<256x128xf32>
    %24 = arith.mulf %2, %23 : vector<256x128xf32>
    %25 = vector.broadcast %22 : vector<1x128xf32> to vector<256x128xf32>
    %26 = arith.addf %24, %25 : vector<256x128xf32>
    %27 = arith.truncf %26 : vector<256x128xf32> to vector<256x128xbf16>
    %c0_9 = arith.constant 0 : index
    %c0_10 = arith.constant 0 : index
    %28 = vector.load %arg3[%c0_9, %c0_10] : memref<128x384xbf16, #tpu.memory_space<vmem>>, vector<128x384xbf16>
    %cst_11 = arith.constant dense<0.000000e+00> : vector<256x384xf32>
    %29 = tpu.matmul %27, %28, %cst_11 {dimension_numbers = #tpu.dot_dimension_numbers<[1], [0], [0], [1], [0, 0, 1, 1], [], []>} : vector<256x128xbf16>, vector<128x384xbf16>, vector<256x384xf32> -> vector<256x384xf32>
    %c0_12 = arith.constant 0 : index
    %c0_13 = arith.constant 0 : index
    %30 = vector.load %arg4[%c0_12, %c0_13] : memref<1x384xf32, #tpu.memory_space<vmem>>, vector<1x384xf32>
    %31 = vector.broadcast %30 : vector<1x384xf32> to vector<256x384xf32>
    %32 = arith.addf %29, %31 : vector<256x384xf32>
    %33 = vector.extract_strided_slice %32 {offsets = [0, 0], sizes = [256, 128], strides = [1, 1]} : vector<256x384xf32> to vector<256x128xf32>
    %34 = arith.truncf %33 : vector<256x128xf32> to vector<256x128xbf16>
    %35 = vector.extract_strided_slice %32 {offsets = [0, 128], sizes = [256, 128], strides = [1, 1]} : vector<256x384xf32> to vector<256x128xf32>
    %36 = arith.truncf %35 : vector<256x128xf32> to vector<256x128xbf16>
    %37 = vector.extract_strided_slice %32 {offsets = [0, 256], sizes = [256, 128], strides = [1, 1]} : vector<256x384xf32> to vector<256x128xf32>
    %38 = arith.truncf %37 : vector<256x128xf32> to vector<256x128xbf16>
    %cst_14 = arith.constant dense<0.000000e+00> : vector<256x256xf32>
    %39 = tpu.matmul %34, %36, %cst_14 {dimension_numbers = #tpu.dot_dimension_numbers<[1], [1], [0], [0], [0, 0, 1, 0], [], []>} : vector<256x128xbf16>, vector<256x128xbf16>, vector<256x256xf32> -> vector<256x256xf32>
    %cst_15 = arith.constant dense<0xFF800000> : vector<256xf32>
    %40 = vector.multi_reduction <maximumf>, %39, %cst_15 [1] : vector<256x256xf32> to vector<256xf32>
    %41 = vector.shape_cast %40 : vector<256xf32> to vector<256x1xf32>
    %42 = vector.broadcast %41 : vector<256x1xf32> to vector<256x256xf32>
    %43 = arith.subf %39, %42 : vector<256x256xf32>
    %44 = math.exp %43 : vector<256x256xf32>
    %cst_16 = arith.constant dense<0.000000e+00> : vector<256xf32>
    %45 = vector.multi_reduction <add>, %44, %cst_16 [1] : vector<256x256xf32> to vector<256xf32>
    %46 = vector.shape_cast %45 : vector<256xf32> to vector<256x1xf32>
    %47 = arith.truncf %44 : vector<256x256xf32> to vector<256x256xbf16>
    %cst_17 = arith.constant dense<0.000000e+00> : vector<256x128xf32>
    %48 = tpu.matmul %47, %38, %cst_17 {dimension_numbers = #tpu.dot_dimension_numbers<[1], [0], [0], [1], [0, 0, 1, 1], [], []>} : vector<256x256xbf16>, vector<256x128xbf16>, vector<256x128xf32> -> vector<256x128xf32>
    %49 = tpu.reciprocal %46 {approx = true} : vector<256x1xf32> -> vector<256x1xf32>
    %50 = vector.broadcast %49 : vector<256x1xf32> to vector<256x128xf32>
    %51 = arith.mulf %48, %50 : vector<256x128xf32>
    %52 = arith.truncf %51 : vector<256x128xf32> to vector<256x128xbf16>
    %c0_18 = arith.constant 0 : index
    %c0_19 = arith.constant 0 : index
    %53 = vector.load %arg5[%c0_18, %c0_19] : memref<128x128xbf16, #tpu.memory_space<vmem>>, vector<128x128xbf16>
    %cst_20 = arith.constant dense<0.000000e+00> : vector<256x128xf32>
    %54 = tpu.matmul %52, %53, %cst_20 {dimension_numbers = #tpu.dot_dimension_numbers<[1], [0], [0], [1], [0, 0, 1, 1], [], []>} : vector<256x128xbf16>, vector<128x128xbf16>, vector<256x128xf32> -> vector<256x128xf32>
    %c0_21 = arith.constant 0 : index
    %c0_22 = arith.constant 0 : index
    %55 = vector.load %arg6[%c0_21, %c0_22] : memref<1x128xf32, #tpu.memory_space<vmem>>, vector<1x128xf32>
    %56 = vector.broadcast %55 : vector<1x128xf32> to vector<256x128xf32>
    %57 = arith.addf %54, %56 : vector<256x128xf32>
    %58 = arith.addf %2, %57 : vector<256x128xf32>
    %59 = tpu.transpose %58, [1, 0] : vector<256x128xf32> -> vector<128x256xf32>
    %c0_23 = arith.constant 0 : index
    %c0_24 = arith.constant 0 : index
    %c0_25 = arith.constant 0 : index
    %60 = vector.load %arg7[%c0_23, %c0_24, %c0_25] : memref<1x128x256xf32, #tpu.memory_space<vmem>>, vector<1x128x256xf32>
    %61 = vector.shape_cast %60 : vector<1x128x256xf32> to vector<128x256xf32>
    %62 = vector.shape_cast %59 : vector<128x256xf32> to vector<1x128x256xf32>
    tpu.vector_store %arg7[%c0_23, %c0_24, %c0_25], %62 {strides = array<i32>} : memref<1x128x256xf32, #tpu.memory_space<vmem>>, vector<1x128x256xf32>,
    return
  }
  func.func @transform_0(%arg0: i32) -> (i32, i32, i32) {
    %c0_i32 = arith.constant 0 : i32
    %c0_i32_0 = arith.constant 0 : i32
    %c0_i32_1 = arith.constant 0 : i32
    return %arg0, %c0_i32, %c0_i32_0 : i32, i32, i32
  }
  func.func @transform_1(%arg0: i32) -> (i32, i32) {
    %c0_i32 = arith.constant 0 : i32
    %c0_i32_0 = arith.constant 0 : i32
    %c0_i32_1 = arith.constant 0 : i32
    return %c0_i32, %c0_i32_0 : i32, i32
  }
  func.func @transform_2(%arg0: i32) -> (i32, i32) {
    %c0_i32 = arith.constant 0 : i32
    %c0_i32_0 = arith.constant 0 : i32
    %c0_i32_1 = arith.constant 0 : i32
    return %c0_i32, %c0_i32_0 : i32, i32
  }
  func.func @transform_3(%arg0: i32) -> (i32, i32) {
    %c0_i32 = arith.constant 0 : i32
    %c0_i32_0 = arith.constant 0 : i32
    %c0_i32_1 = arith.constant 0 : i32
    return %c0_i32, %c0_i32_0 : i32, i32
  }
  func.func @transform_4(%arg0: i32) -> (i32, i32) {
    %c0_i32 = arith.constant 0 : i32
    %c0_i32_0 = arith.constant 0 : i32
    %c0_i32_1 = arith.constant 0 : i32
    return %c0_i32, %c0_i32_0 : i32, i32
  }
  func.func @transform_5(%arg0: i32) -> (i32, i32) {
    %c0_i32 = arith.constant 0 : i32
    %c0_i32_0 = arith.constant 0 : i32
    %c0_i32_1 = arith.constant 0 : i32
    return %c0_i32, %c0_i32_0 : i32, i32
  }
  func.func @transform_6(%arg0: i32) -> (i32, i32, i32) {
    %c0_i32 = arith.constant 0 : i32
    %c0_i32_0 = arith.constant 0 : i32
    %c0_i32_1 = arith.constant 0 : i32
    return %arg0, %c0_i32, %c0_i32_0 : i32, i32, i32
  }
}

</mosaic_0001>

<llo_original>
// kernel: tpu_custom_call.1
$region0: #{tpu_custom_call.1}
  #allocation0 [shape = 'u32[]', space=smem, size = 0x4, offset = 0x4, fixed_abs, tag = 'smem constant byte address 0x4 - core index']
  #allocation1 [shape = 'u32[144,128]{1,0:T(1,128)}', space=vmem, size = 0x12000, scoped, tag = 'internal scratch']
  %s0 = inlined_call_operand.hbm [shape: f32[2,128,256], index: 0, kind: input, shape index: {}]
  %s1 = inlined_call_operand.hbm [shape: f32[128,128], index: 1, kind: input, shape index: {}]
  %s2 = inlined_call_operand.hbm [shape: bf16[128,384], index: 2, kind: input, shape index: {}]
  %s3 = inlined_call_operand.vmem [shape: f32[1,384], index: 3, kind: input, shape index: {}]
  %s4 = inlined_call_operand.hbm [shape: bf16[128,128], index: 4, kind: input, shape index: {}]
  %s5 = inlined_call_operand.vmem [shape: f32[1,128], index: 5, kind: input, shape index: {}]
  %s6 = inlined_call_operand.hbm [shape: f32[2,128,256], index: 6, kind: output, shape index: {}]
  %s7 = sld [smem:[#allocation0]]
  $region73: #{tpu_custom_call.1} parent=0
    _
  %s9 = ssub.s32 1, %s7
  %s10 = scalar_select 0, %s9, %s7
  $region1: #{tpu_custom_call.1} parent=0
    #allocation2 [shape = 'u8[262144]{0}', space=vmem, size = 0x40000, scoped, tag = 'input window, operand 0']
    #allocation3 [shape = 's32[2]{0}', space=sflag, size = 0x8, scoped, tag = 'scoped memory for tpu_custom_call.1']
    #allocation4 [shape = 's32[2]{0}', space=sflag, size = 0x8, scoped, tag = 'scoped memory for tpu_custom_call.1']
    #allocation5 [shape = 'u8[65536]{0}', space=vmem, size = 0x10000, scoped, tag = 'input window, operand 1, single buffered']
    #allocation6 [shape = 's32[1]{0}', space=sflag, size = 0x4, scoped, tag = 'scoped memory for tpu_custom_call.1']
    #allocation7 [shape = 'u8[98304]{0}', space=vmem, size = 0x18000, scoped, tag = 'input window, operand 2, single buffered']
    #allocation8 [shape = 'u8[32768]{0}', space=vmem, size = 0x8000, scoped, tag = 'input window, operand 4, single buffered']
    #allocation9 [shape = 's32[1]{0}', space=sflag, size = 0x4, scoped, tag = 'scoped memory for tpu_custom_call.1']
    #allocation10 [shape = 'u8[262144]{0}', space=vmem, size = 0x40000, scoped, tag = 'output window, operand 0']
    %11 = vsyncpa [#allocation3], 0
    %s12 = scalar_lea.sflag [#allocation3], 1
    %13 = vsyncpa %s12, 0
    %14 = vsyncpa [#allocation6], 0
    %15 = vsyncpa [#allocation9], 0
    %16 = vsyncpa [#allocation4], 0
    %s17 = scalar_lea.sflag [#allocation4], 1
    %18 = vsyncpa %s17, 0
    loop: start=0, step=1, limit=4
    $region2: #{tpu_custom_call.1} parent=1 // loop_pre_header
      _
    $region3: #{tpu_custom_call.1} parent=1 // loop_header
      %s20 = sphi 0, %s24
      %p21 = scmp.ge.s32.totalorder %s20, 4
      %s30 = sphi 0, %s32
      %s33 = sphi 0, %s30
      %s34 = sphi 0, %s33
      %s50 = sphi 0, %s34
      %s54 = sphi 0, %s54
      %s56 = sphi 0, %s54
      %s57 = sphi 0, %s56
      %s71 = sphi 0, %s57
      %s75 = sphi 0, %s75
      %s77 = sphi 0, %s75
      %s78 = sphi 0, %s77
      %s92 = sphi 0, %s78
      %s96 = sphi 0, %s96
      %s98 = sphi 0, %s96
      %s99 = sphi 0, %s98
      %s113 = sphi 0, %s99
      %s117 = sphi 0, %s117
      %s119 = sphi 0, %s117
      %s120 = sphi 0, %s119
      %s134 = sphi 0, %s120
      %s138 = sphi 0, %s138
      %s140 = sphi 0, %s138
      %s141 = sphi 0, %s140
      %s155 = sphi 0, %s141
      %s161 = sphi 0, %s163
      %s164 = sphi 0, %s161
      %s165 = sphi 0, %s164
      %s181 = sphi 0, %s165
    $region4: #{tpu_custom_call.1} parent=1 // loop_header_branch
      %23 = sbr.rel (%p21) target = $region8
    $region5: #{tpu_custom_call.1} parent=1 // loop_body
      %s25 = ssub.s32 %s20, 1
      %s26 = ssub.s32 %s20, 2
      %s27 = sadd.s32 %s20, 1
      %s28 = ssub.s32 %s20, %s27
      %p29 = scmp.eq.s32.totalorder %s28, 0
      %s31 = sadd.s32 %s30, 1
      %s32 = scalar_select %p29, %s30, %s31
      %p35 = pneg %p29
      %p36 = scmp.eq.s32.totalorder %s20, 1
      %p37 = por %p35, %p36
      %p38 = scmp.ne.s32.totalorder %s30, %s33
      %p39 = scmp.eq.s32.totalorder %s20, 0
      %p40 = por %p38, %p39
      %p41 = scmp.ne.s32.totalorder %s30, %s33
      %p42 = scmp.eq.s32.totalorder %s25, 1
      %p43 = por %p41, %p42
      %p44 = scmp.ne.s32.totalorder %s33, %s34
      %p45 = scmp.eq.s32.totalorder %s25, 0
      %p46 = por %p44, %p45
      %p47 = scmp.ne.s32.totalorder %s33, %s34
      %p48 = scmp.eq.s32.totalorder %s26, 1
      %p49 = por %p47, %p48
      %p51 = scmp.ne.s32.totalorder %s34, %s50
      %p52 = scmp.eq.s32.totalorder %s26, 0
      %p53 = por %p51, %p52
      %s55 = sadd.s32 %s54, 1
      %p58 = scmp.eq.s32.totalorder %s20, 1
      %p59 = scmp.ne.s32.totalorder %s54, %s56
      %p60 = scmp.eq.s32.totalorder %s20, 0
      %p61 = por %p59, %p60
      %p62 = scmp.ne.s32.totalorder %s54, %s56
      %p63 = scmp.eq.s32.totalorder %s25, 1
      %p64 = por %p62, %p63
      %p65 = scmp.ne.s32.totalorder %s56, %s57
      %p66 = scmp.eq.s32.totalorder %s25, 0
      %p67 = por %p65, %p66
      %p68 = scmp.ne.s32.totalorder %s56, %s57
      %p69 = scmp.eq.s32.totalorder %s26, 1
      %p70 = por %p68, %p69
      %p72 = scmp.ne.s32.totalorder %s57, %s71
      %p73 = scmp.eq.s32.totalorder %s26, 0
      %p74 = por %p72, %p73
      %s76 = sadd.s32 %s75, 1
      %p79 = scmp.eq.s32.totalorder %s20, 1
      %p80 = scmp.ne.s32.totalorder %s75, %s77
      %p81 = scmp.eq.s32.totalorder %s20, 0
      %p82 = por %p80, %p81
      %p83 = scmp.ne.s32.totalorder %s75, %s77
      %p84 = scmp.eq.s32.totalorder %s25, 1
      %p85 = por %p83, %p84
      %p86 = scmp.ne.s32.totalorder %s77, %s78
      %p87 = scmp.eq.s32.totalorder %s25, 0
      %p88 = por %p86, %p87
      %p89 = scmp.ne.s32.totalorder %s77, %s78
      %p90 = scmp.eq.s32.totalorder %s26, 1
      %p91 = por %p89, %p90
      %p93 = scmp.ne.s32.totalorder %s78, %s92
      %p94 = scmp.eq.s32.totalorder %s26, 0
      %p95 = por %p93, %p94
      %s97 = sadd.s32 %s96, 1
      %p100 = scmp.eq.s32.totalorder %s20, 1
      %p101 = scmp.ne.s32.totalorder %s96, %s98
      %p102 = scmp.eq.s32.totalorder %s20, 0
      %p103 = por %p101, %p102
      %p104 = scmp.ne.s32.totalorder %s96, %s98
      %p105 = scmp.eq.s32.totalorder %s25, 1
      %p106 = por %p104, %p105
      %p107 = scmp.ne.s32.totalorder %s98, %s99
      %p108 = scmp.eq.s32.totalorder %s25, 0
      %p109 = por %p107, %p108
      %p110 = scmp.ne.s32.totalorder %s98, %s99
      %p111 = scmp.eq.s32.totalorder %s26, 1
      %p112 = por %p110, %p111
      %p114 = scmp.ne.s32.totalorder %s99, %s113
      %p115 = scmp.eq.s32.totalorder %s26, 0
      %p116 = por %p114, %p115
      %s118 = sadd.s32 %s117, 1
      %p121 = scmp.eq.s32.totalorder %s20, 1
      %p122 = scmp.ne.s32.totalorder %s117, %s119
      %p123 = scmp.eq.s32.totalorder %s20, 0
      %p124 = por %p122, %p123
      %p125 = scmp.ne.s32.totalorder %s117, %s119
      %p126 = scmp.eq.s32.totalorder %s25, 1
      %p127 = por %p125, %p126
      %p128 = scmp.ne.s32.totalorder %s119, %s120
      %p129 = scmp.eq.s32.totalorder %s25, 0
      %p130 = por %p128, %p129
      %p131 = scmp.ne.s32.totalorder %s119, %s120
      %p132 = scmp.eq.s32.totalorder %s26, 1
      %p133 = por %p131, %p132
      %p135 = scmp.ne.s32.totalorder %s120, %s134
      %p136 = scmp.eq.s32.totalorder %s26, 0
      %p137 = por %p135, %p136
      %s139 = sadd.s32 %s138, 1
      %p142 = scmp.eq.s32.totalorder %s20, 1
      %p143 = scmp.ne.s32.totalorder %s138, %s140
      %p144 = scmp.eq.s32.totalorder %s20, 0
      %p145 = por %p143, %p144
      %p146 = scmp.ne.s32.totalorder %s138, %s140
      %p147 = scmp.eq.s32.totalorder %s25, 1
      %p148 = por %p146, %p147
      %p149 = scmp.ne.s32.totalorder %s140, %s141
      %p150 = scmp.eq.s32.totalorder %s25, 0
      %p151 = por %p149, %p150
      %p152 = scmp.ne.s32.totalorder %s140, %s141
      %p153 = scmp.eq.s32.totalorder %s26, 1
      %p154 = por %p152, %p153
      %p156 = scmp.ne.s32.totalorder %s141, %s155
      %p157 = scmp.eq.s32.totalorder %s26, 0
      %p158 = por %p156, %p157
      %s159 = ssub.s32 %s20, %s27
      %p160 = scmp.eq.s32.totalorder %s159, 0
      %s162 = sadd.s32 %s161, 1
      %s163 = scalar_select %p160, %s161, %s162
      %p166 = pneg %p160
      %p167 = scmp.eq.s32.totalorder %s20, 1
      %p168 = por %p166, %p167
      %p169 = scmp.ne.s32.totalorder %s161, %s164
      %p170 = scmp.eq.s32.totalorder %s20, 0
      %p171 = por %p169, %p170
      %p172 = scmp.ne.s32.totalorder %s161, %s164
      %p173 = scmp.eq.s32.totalorder %s25, 1
      %p174 = por %p172, %p173
      %p175 = scmp.ne.s32.totalorder %s164, %s165
      %p176 = scmp.eq.s32.totalorder %s25, 0
      %p177 = por %p175, %p176
      %p178 = scmp.ne.s32.totalorder %s164, %s165
      %p179 = scmp.eq.s32.totalorder %s26, 1
      %p180 = por %p178, %p179
      %p182 = scmp.ne.s32.totalorder %s165, %s181
      %p183 = scmp.eq.s32.totalorder %s26, 0
      %p184 = por %p182, %p183
      %p185 = scmp.le.s32.totalorder 1, %s20
      %p186 = scmp.lt.s32.totalorder %s20, 3
      %p187 = pnand %p185, %p186
      %p188 = pneg %p187
      // Predicated region
      $region9: #{tpu_custom_call.1} parent=5 // pred_check
        _
      $region10: #{tpu_custom_call.1} parent=5 // pred_check_branch
        %190 = sbr.rel (%p187) target = $region12
      $region11: #{tpu_custom_call.1} parent=5 // pred_region
        %s191 = ssub.s32 %s20, 1
        // Predicated region
        $region13: #{tpu_custom_call.1} parent=11 // pred_check
          %p192 = pneg %p67
        $region14: #{tpu_custom_call.1} parent=11 // pred_check_branch
          %194 = sbr.rel (%p192) target = $region16
        $region15: #{tpu_custom_call.1} parent=11 // pred_region
          %s196 = ssub.s32 2048, 2048
          %197 = vsyncadd [#allocation6], %s196
          %s198 = sshll.u32 [#allocation5], 4
          %s199 = int_to_ptr.vmem [resolvable:$true] %s198
          %204 = dma.hbm_to_vmem [thread:$0]  %s1, 2048, %s199, [#allocation6], 128, 128, 8
        $region16: #{tpu_custom_call.1} parent=11 // pred_fallthru
          _
        // Predicated region
        $region17: #{tpu_custom_call.1} parent=11 // pred_check
          %p205 = pneg %p88
        $region18: #{tpu_custom_call.1} parent=11 // pred_check_branch
          %207 = sbr.rel (%p205) target = $region20
        $region19: #{tpu_custom_call.1} parent=11 // pred_region
          %s209 = ssub.s32 3072, 3072
          %210 = vsyncadd [#allocation6], %s209
          %s211 = sshll.u32 [#allocation7], 4
          %s212 = int_to_ptr.vmem [resolvable:$true] %s211
          %217 = dma.hbm_to_vmem [thread:$0]  %s2, 3072, %s212, [#allocation6], 192, 192, 12
        $region20: #{tpu_custom_call.1} parent=11 // pred_fallthru
          _
        // Predicated region
        $region21: #{tpu_custom_call.1} parent=11 // pred_check
          %p218 = pneg %p109
        $region22: #{tpu_custom_call.1} parent=11 // pred_check_branch
          %220 = sbr.rel (%p218) target = $region24
        $region23: #{tpu_custom_call.1} parent=11 // pred_region
          _
        $region24: #{tpu_custom_call.1} parent=11 // pred_fallthru
          _
        // Predicated region
        $region25: #{tpu_custom_call.1} parent=11 // pred_check
          %p221 = pneg %p130
        $region26: #{tpu_custom_call.1} parent=11 // pred_check_branch
          %223 = sbr.rel (%p221) target = $region28
        $region27: #{tpu_custom_call.1} parent=11 // pred_region
          %s225 = ssub.s32 1024, 1024
          %226 = vsyncadd [#allocation9], %s225
          %s227 = sshll.u32 [#allocation8], 4
          %s228 = int_to_ptr.vmem [resolvable:$true] %s227
          %233 = dma.hbm_to_vmem [thread:$0]  %s4, 1024, %s228, [#allocation9], 64, 64, 4
        $region28: #{tpu_custom_call.1} parent=11 // pred_fallthru
          _
        // Predicated region
        $region29: #{tpu_custom_call.1} parent=11 // pred_check
          %p234 = pneg %p151
        $region30: #{tpu_custom_call.1} parent=11 // pred_check_branch
          %236 = sbr.rel (%p234) target = $region32
        $region31: #{tpu_custom_call.1} parent=11 // pred_region
          _
        $region32: #{tpu_custom_call.1} parent=11 // pred_fallthru
          _
      $region12: #{tpu_custom_call.1} parent=5 // pred_fallthru
        _
      %p237 = scmp.lt.s32.totalorder %s20, 2
      // Predicated region
      $region33: #{tpu_custom_call.1} parent=5 // pred_check
        %p238 = pneg %p237
      $region34: #{tpu_custom_call.1} parent=5 // pred_check_branch
        %240 = sbr.rel (%p238) target = $region36
      $region35: #{tpu_custom_call.1} parent=5 // pred_region
        // Predicated region
        $region37: #{tpu_custom_call.1} parent=35 // pred_check
          %p241 = pneg %p40
        $region38: #{tpu_custom_call.1} parent=35 // pred_check_branch
          %243 = sbr.rel (%p241) target = $region40
        $region39: #{tpu_custom_call.1} parent=35 // pred_region
          %s244 = sand.u32 %s30, 1
          %s245 = scalar_lea.sflag [#allocation3], %s244
          %s246 = sand.u32 %s30, 1
          %s247 = smul.addr %s246, 256
          %s248 = scalar_lea.vmem [#allocation2], %s247
          %s250 = ssub.s32 4096, 4096
          %251 = vsyncadd %s245, %s250
          %s252 = smul.addr %s20, 32
          %s253 = smul.addr %s252, 128
          %s254 = scalar_lea.hbm %s0, %s253
          %s255 = sshll.u32 %s248, 4
          %s256 = int_to_ptr.vmem [resolvable:$true] %s255
          %261 = dma.hbm_to_vmem [thread:$0]  %s254, 4096, %s256, %s245, 256, 256, 16
        $region40: #{tpu_custom_call.1} parent=35 // pred_fallthru
          _
      $region36: #{tpu_custom_call.1} parent=5 // pred_fallthru
        _
      %p262 = scmp.le.s32.totalorder 1, %s20
      %p263 = scmp.lt.s32.totalorder %s20, 3
      %p264 = pnand %p262, %p263
      %p265 = pneg %p264
      // Predicated region
      $region41: #{tpu_custom_call.1} parent=5 // pred_check
        _
      $region42: #{tpu_custom_call.1} parent=5 // pred_check_branch
        %267 = sbr.rel (%p264) target = $region44
      $region43: #{tpu_custom_call.1} parent=5 // pred_region
        %s268 = ssub.s32 %s20, 1
        %s269 = sand.u32 %s33, 1
        %s270 = scalar_lea.sflag [#allocation3], %s269
        %s271 = sand.u32 %s33, 1
        %s272 = smul.addr %s271, 256
        %s273 = scalar_lea.vmem [#allocation2], %s272
        // Predicated region
        $region45: #{tpu_custom_call.1} parent=43 // pred_check
          %p274 = pneg %p46
        $region46: #{tpu_custom_call.1} parent=43 // pred_check_branch
          %276 = sbr.rel (%p274) target = $region48
        $region47: #{tpu_custom_call.1} parent=43 // pred_region
          %277 = dma.done %s270, 4096
        $region48: #{tpu_custom_call.1} parent=43 // pred_fallthru
          _
        // Predicated region
        $region49: #{tpu_custom_call.1} parent=43 // pred_check
          %p278 = pneg %p67
        $region50: #{tpu_custom_call.1} parent=43 // pred_check_branch
          %280 = sbr.rel (%p278) target = $region52
        $region51: #{tpu_custom_call.1} parent=43 // pred_region
          %281 = dma.done [#allocation6], 2048
        $region52: #{tpu_custom_call.1} parent=43 // pred_fallthru
          _
        // Predicated region
        $region53: #{tpu_custom_call.1} parent=43 // pred_check
          %p282 = pneg %p88
        $region54: #{tpu_custom_call.1} parent=43 // pred_check_branch
          %284 = sbr.rel (%p282) target = $region56
        $region55: #{tpu_custom_call.1} parent=43 // pred_region
          %285 = dma.done [#allocation6], 3072
        $region56: #{tpu_custom_call.1} parent=43 // pred_fallthru
          _
        // Predicated region
        $region57: #{tpu_custom_call.1} parent=43 // pred_check
          %p286 = pneg %p130
        $region58: #{tpu_custom_call.1} parent=43 // pred_check_branch
          %288 = sbr.rel (%p286) target = $region60
        $region59: #{tpu_custom_call.1} parent=43 // pred_region
          %289 = dma.done [#allocation9], 1024
        $region60: #{tpu_custom_call.1} parent=43 // pred_fallthru
          _
        %s290 = sand.u32 %s33, 1
        %s291 = scalar_lea.sflag [#allocation3], %s290
        %s292 = sand.u32 %s33, 1
        %s293 = smul.addr %s292, 256
        %s294 = scalar_lea.vmem [#allocation2], %s293
        %p295 = pneg %p46
        %p296 = pneg %p43
        %p297 = pneg %p67
        %p298 = pneg %p64
        %p299 = pneg %p88
        %p300 = pneg %p85
        %p301 = pneg %p109
        %p302 = pneg %p106
        %p303 = pneg %p130
        %p304 = pneg %p127
        %p305 = pneg %p151
        %p306 = pneg %p148
        %p307 = pneg %p177
        %p308 = pneg %p174
        %s309 = sand.u32 %s164, 1
        %s310 = scalar_lea.sflag [#allocation4], %s309
        %s311 = sand.u32 %s164, 1
        %s312 = smul.addr %s311, 256
        %s313 = scalar_lea.vmem [#allocation10], %s312
        %v315 = vld [vmem:[%s273] sm:$0xff]
        %v316 = vld [vmem:[%s273 + $0x8] sm:$0xff]
        %v317 = vld [vmem:[%s273 + $0x10] sm:$0xff]
        %v318 = vld [vmem:[%s273 + $0x18] sm:$0xff]
        %v319 = vld [vmem:[%s273 + $0x20] sm:$0xff]
        %v320 = vld [vmem:[%s273 + $0x28] sm:$0xff]
        %v321 = vld [vmem:[%s273 + $0x30] sm:$0xff]
        %v322 = vld [vmem:[%s273 + $0x38] sm:$0xff]
        %v323 = vld [vmem:[%s273 + $0x40] sm:$0xff]
        %v324 = vld [vmem:[%s273 + $0x48] sm:$0xff]
        %v325 = vld [vmem:[%s273 + $0x50] sm:$0xff]
        %v326 = vld [vmem:[%s273 + $0x58] sm:$0xff]
        %v327 = vld [vmem:[%s273 + $0x60] sm:$0xff]
        %v328 = vld [vmem:[%s273 + $0x68] sm:$0xff]
        %v329 = vld [vmem:[%s273 + $0x70] sm:$0xff]
        %v330 = vld [vmem:[%s273 + $0x78] sm:$0xff]
        %v331 = vld [vmem:[%s273 + $0x80] sm:$0xff]
        %v332 = vld [vmem:[%s273 + $0x88] sm:$0xff]
        %v333 = vld [vmem:[%s273 + $0x90] sm:$0xff]
        %v334 = vld [vmem:[%s273 + $0x98] sm:$0xff]
        %v335 = vld [vmem:[%s273 + $0xa0] sm:$0xff]
        %v336 = vld [vmem:[%s273 + $0xa8] sm:$0xff]
        %v337 = vld [vmem:[%s273 + $0xb0] sm:$0xff]
        %v338 = vld [vmem:[%s273 + $0xb8] sm:$0xff]
        %v339 = vld [vmem:[%s273 + $0xc0] sm:$0xff]
        %v340 = vld [vmem:[%s273 + $0xc8] sm:$0xff]
        %v341 = vld [vmem:[%s273 + $0xd0] sm:$0xff]
        %v342 = vld [vmem:[%s273 + $0xd8] sm:$0xff]
        %v343 = vld [vmem:[%s273 + $0xe0] sm:$0xff]
        %v344 = vld [vmem:[%s273 + $0xe8] sm:$0xff]
        %v345 = vld [vmem:[%s273 + $0xf0] sm:$0xff]
        %v346 = vld [vmem:[%s273 + $0xf8] sm:$0xff]
        %347 = vxpose.xlu0.b32.start [1/16] %v315, 128
        %348 = vxpose.xlu0.b32.cont [2/16] %v317, 128
        %349 = vxpose.xlu0.b32.cont [3/16] %v319, 128
        %350 = vxpose.xlu0.b32.cont [4/16] %v321, 128
        %351 = vxpose.xlu0.b32.cont [5/16] %v323, 128
        %352 = vxpose.xlu0.b32.cont [6/16] %v325, 128
        %353 = vxpose.xlu0.b32.cont [7/16] %v327, 128
        %354 = vxpose.xlu0.b32.cont [8/16] %v329, 128
        %355 = vxpose.xlu0.b32.cont [9/16] %v331, 128
        %356 = vxpose.xlu0.b32.cont [10/16] %v333, 128
        %357 = vxpose.xlu0.b32.cont [11/16] %v335, 128
        %358 = vxpose.xlu0.b32.cont [12/16] %v337, 128
        %359 = vxpose.xlu0.b32.cont [13/16] %v339, 128
        %360 = vxpose.xlu0.b32.cont [14/16] %v341, 128
        %361 = vxpose.xlu0.b32.cont [15/16] %v343, 128
        %362 = vxpose.xlu0.b32.end [16/16] %v345, 128
        %v363 = vpop.trf.xlu0
        %v364 = vpop.trf.xlu0
        %v365 = vpop.trf.xlu0
        %v366 = vpop.trf.xlu0
        %v367 = vpop.trf.xlu0
        %v368 = vpop.trf.xlu0
        %v369 = vpop.trf.xlu0
        %v370 = vpop.trf.xlu0
        %v371 = vpop.trf.xlu0
        %v372 = vpop.trf.xlu0
        %v373 = vpop.trf.xlu0
        %v374 = vpop.trf.xlu0
        %v375 = vpop.trf.xlu0
        %v376 = vpop.trf.xlu0
        %v377 = vpop.trf.xlu0
        %v378 = vpop.trf.xlu0
        %379 = vxpose.xlu0.b32.start [1/16] %v316, 128
        %380 = vxpose.xlu0.b32.cont [2/16] %v318, 128
        %381 = vxpose.xlu0.b32.cont [3/16] %v320, 128
        %382 = vxpose.xlu0.b32.cont [4/16] %v322, 128
        %383 = vxpose.xlu0.b32.cont [5/16] %v324, 128
        %384 = vxpose.xlu0.b32.cont [6/16] %v326, 128
        %385 = vxpose.xlu0.b32.cont [7/16] %v328, 128
        %386 = vxpose.xlu0.b32.cont [8/16] %v330, 128
        %387 = vxpose.xlu0.b32.cont [9/16] %v332, 128
        %388 = vxpose.xlu0.b32.cont [10/16] %v334, 128
        %389 = vxpose.xlu0.b32.cont [11/16] %v336, 128
        %390 = vxpose.xlu0.b32.cont [12/16] %v338, 128
        %391 = vxpose.xlu0.b32.cont [13/16] %v340, 128
        %392 = vxpose.xlu0.b32.cont [14/16] %v342, 128
        %393 = vxpose.xlu0.b32.cont [15/16] %v344, 128
        %394 = vxpose.xlu0.b32.end [16/16] %v346, 128
        %v395 = vpop.trf.xlu0
        %v396 = vpop.trf.xlu0
        %v397 = vpop.trf.xlu0
        %v398 = vpop.trf.xlu0
        %v399 = vpop.trf.xlu0
        %v400 = vpop.trf.xlu0
        %v401 = vpop.trf.xlu0
        %v402 = vpop.trf.xlu0
        %v403 = vpop.trf.xlu0
        %v404 = vpop.trf.xlu0
        %v405 = vpop.trf.xlu0
        %v406 = vpop.trf.xlu0
        %v407 = vpop.trf.xlu0
        %v408 = vpop.trf.xlu0
        %v409 = vpop.trf.xlu0
        %v410 = vpop.trf.xlu0
        %v411 = vadd.f32 %v363, %v364
        %v412 = vadd.f32 %v411, %v365
        %v413 = vadd.f32 %v412, %v366
        %v414 = vadd.f32 %v413, %v367
        %v415 = vadd.f32 %v414, %v368
        %v416 = vadd.f32 %v415, %v369
        %v417 = vadd.f32 %v416, %v370
        %v418 = vadd.f32 %v417, %v371
        %v419 = vadd.f32 %v418, %v372
        %v420 = vadd.f32 %v419, %v373
        %v421 = vadd.f32 %v420, %v374
        %v422 = vadd.f32 %v421, %v375
        %v423 = vadd.f32 %v422, %v376
        %v424 = vadd.f32 %v423, %v377
        %v425 = vadd.f32 %v424, %v378
        %v426 = vadd.f32 %v425, %v395
        %v427 = vadd.f32 %v426, %v396
        %v428 = vadd.f32 %v427, %v397
        %v429 = vadd.f32 %v428, %v398
        %v430 = vadd.f32 %v429, %v399
        %v431 = vadd.f32 %v430, %v400
        %v432 = vadd.f32 %v431, %v401
        %v433 = vadd.f32 %v432, %v402
        %v434 = vadd.f32 %v433, %v403
        %v435 = vadd.f32 %v434, %v404
        %v436 = vadd.f32 %v435, %v405
        %v437 = vadd.f32 %v436, %v406
        %v438 = vadd.f32 %v437, %v407
        %v439 = vadd.f32 %v438, %v408
        %v440 = vadd.f32 %v439, %v409
        %v441 = vadd.f32 %v440, %v410
        %v442 = vrot.slane %v441, 4
        %v443 = vadd.f32 %v441, %v442
        %v444 = vrot.slane %v443, 2
        %v445 = vadd.f32 %v443, %v444
        %v446 = vrot.slane %v445, 1
        %v447 = vadd.f32 %v445, %v446
        %v448 = vmul.f32 %v363, %v363
        %v449 = vmul.f32 %v364, %v364
        %v450 = vmul.f32 %v365, %v365
        %v451 = vmul.f32 %v366, %v366
        %v452 = vmul.f32 %v367, %v367
        %v453 = vmul.f32 %v368, %v368
        %v454 = vmul.f32 %v369, %v369
        %v455 = vmul.f32 %v370, %v370
        %v456 = vmul.f32 %v371, %v371
        %v457 = vmul.f32 %v372, %v372
        %v458 = vmul.f32 %v373, %v373
        %v459 = vmul.f32 %v374, %v374
        %v460 = vmul.f32 %v375, %v375
        %v461 = vmul.f32 %v376, %v376
        %v462 = vmul.f32 %v377, %v377
        %v463 = vmul.f32 %v378, %v378
        %v464 = vmul.f32 %v395, %v395
        %v465 = vmul.f32 %v396, %v396
        %v466 = vmul.f32 %v397, %v397
        %v467 = vmul.f32 %v398, %v398
        %v468 = vmul.f32 %v399, %v399
        %v469 = vmul.f32 %v400, %v400
        %v470 = vmul.f32 %v401, %v401
        %v471 = vmul.f32 %v402, %v402
        %v472 = vmul.f32 %v403, %v403
        %v473 = vmul.f32 %v404, %v404
        %v474 = vmul.f32 %v405, %v405
        %v475 = vmul.f32 %v406, %v406
        %v476 = vmul.f32 %v407, %v407
        %v477 = vmul.f32 %v408, %v408
        %v478 = vmul.f32 %v409, %v409
        %v479 = vmul.f32 %v410, %v410
        %v480 = vadd.f32 %v448, %v449
        %v481 = vadd.f32 %v480, %v450
        %v482 = vadd.f32 %v481, %v451
        %v483 = vadd.f32 %v482, %v452
        %v484 = vadd.f32 %v483, %v453
        %v485 = vadd.f32 %v484, %v454
        %v486 = vadd.f32 %v485, %v455
        %v487 = vadd.f32 %v486, %v456
        %v488 = vadd.f32 %v487, %v457
        %v489 = vadd.f32 %v488, %v458
        %v490 = vadd.f32 %v489, %v459
        %v491 = vadd.f32 %v490, %v460
        %v492 = vadd.f32 %v491, %v461
        %v493 = vadd.f32 %v492, %v462
        %v494 = vadd.f32 %v493, %v463
        %v495 = vadd.f32 %v494, %v464
        %v496 = vadd.f32 %v495, %v465
        %v497 = vadd.f32 %v496, %v466
        %v498 = vadd.f32 %v497, %v467
        %v499 = vadd.f32 %v498, %v468
        %v500 = vadd.f32 %v499, %v469
        %v501 = vadd.f32 %v500, %v470
        %v502 = vadd.f32 %v501, %v471
        %v503 = vadd.f32 %v502, %v472
        %v504 = vadd.f32 %v503, %v473
        %v505 = vadd.f32 %v504, %v474
        %v506 = vadd.f32 %v505, %v475
        %v507 = vadd.f32 %v506, %v476
        %v508 = vadd.f32 %v507, %v477
        %v509 = vadd.f32 %v508, %v478
        %v510 = vadd.f32 %v509, %v479
        %v511 = vrot.slane %v510, 4
        %v512 = vadd.f32 %v510, %v511
        %v513 = vrot.slane %v512, 2
        %v514 = vadd.f32 %v512, %v513
        %v515 = vrot.slane %v514, 1
        %v516 = vadd.f32 %v514, %v515
        %vm517 = vcmask 1040384
        %v518 = vsel %vm517, %v447, %v516
        %v519 = vld [vmem:[#allocation5] sm:$0xff]
        %v520 = vld [vmem:[#allocation5 + $0x8] sm:$0xff]
        %v521 = vld [vmem:[#allocation5 + $0x10] sm:$0xff]
        %v522 = vld [vmem:[#allocation5 + $0x18] sm:$0xff]
        %v523 = vld [vmem:[#allocation5 + $0x20] sm:$0xff]
        %v524 = vld [vmem:[#allocation5 + $0x28] sm:$0xff]
        %v525 = vld [vmem:[#allocation5 + $0x30] sm:$0xff]
        %v526 = vld [vmem:[#allocation5 + $0x38] sm:$0xff]
        %v527 = vld [vmem:[#allocation5 + $0x40] sm:$0xff]
        %v528 = vld [vmem:[#allocation5 + $0x48] sm:$0xff]
        %v529 = vld [vmem:[#allocation5 + $0x50] sm:$0xff]
        %v530 = vld [vmem:[#allocation5 + $0x58] sm:$0xff]
        %v531 = vld [vmem:[#allocation5 + $0x60] sm:$0xff]
        %v532 = vld [vmem:[#allocation5 + $0x68] sm:$0xff]
        %v533 = vld [vmem:[#allocation5 + $0x70] sm:$0xff]
        %v534 = vld [vmem:[#allocation5 + $0x78] sm:$0xff]
        %535 = vmatprep.subr.mxu0 0.0
        %536 = vmatpush1.msra.mxu0 %v534
        %537 = vmatprep.subr.mxu0 0.0
        %538 = vmatpush1.msra.mxu0 %v533
        %539 = vmatprep.subr.mxu0 0.0
        %540 = vmatpush1.msra.mxu0 %v532
        %541 = vmatprep.subr.mxu0 0.0
        %542 = vmatpush1.msra.mxu0 %v531
        %543 = vmatprep.subr.mxu0 0.0
        %544 = vmatpush1.msra.mxu0 %v530
        %545 = vmatprep.subr.mxu0 0.0
        %546 = vmatpush1.msra.mxu0 %v529
        %547 = vmatprep.subr.mxu0 0.0
        %548 = vmatpush1.msra.mxu0 %v528
        %549 = vmatprep.subr.mxu0 0.0
        %550 = vmatpush1.msra.mxu0 %v527
        %551 = vmatprep.subr.mxu0 0.0
        %552 = vmatpush1.msra.mxu0 %v526
        %553 = vmatprep.subr.mxu0 0.0
        %554 = vmatpush1.msra.mxu0 %v525
        %555 = vmatprep.subr.mxu0 0.0
        %556 = vmatpush1.msra.mxu0 %v524
        %557 = vmatprep.subr.mxu0 0.0
        %558 = vmatpush1.msra.mxu0 %v523
        %559 = vmatprep.subr.mxu0 0.0
        %560 = vmatpush1.msra.mxu0 %v522
        %561 = vmatprep.subr.mxu0 0.0
        %562 = vmatpush1.msra.mxu0 %v521
        %563 = vmatprep.subr.mxu0 0.0
        %564 = vmatpush1.msra.mxu0 %v520
        %565 = vmatprep.subr.mxu0 0.0
        %566 = vmatpush1.msra.mxu0 %v519
        %567 = vmatprep.subr.mxu0 0.0
        %568 = vmatpush2.msra.mxu0 0.0
        %569 = vmatprep.subr.mxu0 0.0
        %570 = vmatpush2.msra.mxu0 0.0
        %571 = vmatprep.subr.mxu0 0.0
        %572 = vmatpush2.msra.mxu0 0.0
        %573 = vmatprep.subr.mxu0 0.0
        %574 = vmatpush2.msra.mxu0 0.0
        %575 = vmatprep.subr.mxu0 0.0
        %576 = vmatpush2.msra.mxu0 0.0
        %577 = vmatprep.subr.mxu0 0.0
        %578 = vmatpush2.msra.mxu0 0.0
        %579 = vmatprep.subr.mxu0 0.0
        %580 = vmatpush2.msra.mxu0 0.0
        %581 = vmatprep.subr.mxu0 0.0
        %582 = vmatpush2.msra.mxu0 0.0
        %583 = vmatprep.subr.mxu0 0.0
        %584 = vmatpush2.msra.mxu0 0.0
        %585 = vmatprep.subr.mxu0 0.0
        %586 = vmatpush2.msra.mxu0 0.0
        %587 = vmatprep.subr.mxu0 0.0
        %588 = vmatpush2.msra.mxu0 0.0
        %589 = vmatprep.subr.mxu0 0.0
        %590 = vmatpush2.msra.mxu0 0.0
        %591 = vmatprep.subr.mxu0 0.0
        %592 = vmatpush2.msra.mxu0 0.0
        %593 = vmatprep.subr.mxu0 0.0
        %594 = vmatpush2.msra.mxu0 0.0
        %595 = vmatprep.subr.mxu0 0.0
        %596 = vmatpush2.msra.mxu0 0.0
        %597 = vmatprep.subr.mxu0 0.0
        %598 = vmatpush2.msra.mxu0 0.0
        %599 = vmatprep.mubr.f32.mxu0 0.0
        %600 = vmatmul.mubr.f32.gmra.mxu0 %v518
        %v601 = vpop.f32.mrf.mxu0
        %v602 = vadd.f32 0.0, %v601
        %v603 = vpop.f32.mrf.mxu0
        %604 = vdwg.mxu0
        %v605 = vmul.f32 %v602, %v602
        %v607 = vrot.slane %v605, 7
        %v609 = vsub.f32 %v602, %v607
        %v610 = vmax.f32 %v609, 0.0
        %v611 = vadd.f32 %v610, 1e-06
        %v612 = vrsqrt.pop %v611
        %v613 = vsub.f32 0.0, %v602
        %v615 = vrot.slane %v612, 1
        %v617 = vmul.f32 %v613, %v615
        %v618 = vlaneseq
        %v619 = vshrl.u32 %v618, 7
        %v620 = vsub.s32 1, %v619
        %v621 = vrot.slane %v612, %v620
        %v622 = vmul.f32 %v363, %v621
        %v623 = vmul.f32 %v364, %v621
        %v624 = vmul.f32 %v365, %v621
        %v625 = vmul.f32 %v366, %v621
        %v626 = vmul.f32 %v367, %v621
        %v627 = vmul.f32 %v368, %v621
        %v628 = vmul.f32 %v369, %v621
        %v629 = vmul.f32 %v370, %v621
        %v630 = vmul.f32 %v371, %v621
        %v631 = vmul.f32 %v372, %v621
        %v632 = vmul.f32 %v373, %v621
        %v633 = vmul.f32 %v374, %v621
        %v634 = vmul.f32 %v375, %v621
        %v635 = vmul.f32 %v376, %v621
        %v636 = vmul.f32 %v377, %v621
        %v637 = vmul.f32 %v378, %v621
        %v638 = vmul.f32 %v395, %v621
        %v639 = vmul.f32 %v396, %v621
        %v640 = vmul.f32 %v397, %v621
        %v641 = vmul.f32 %v398, %v621
        %v642 = vmul.f32 %v399, %v621
        %v643 = vmul.f32 %v400, %v621
        %v644 = vmul.f32 %v401, %v621
        %v645 = vmul.f32 %v402, %v621
        %v646 = vmul.f32 %v403, %v621
        %v647 = vmul.f32 %v404, %v621
        %v648 = vmul.f32 %v405, %v621
        %v649 = vmul.f32 %v406, %v621
        %v650 = vmul.f32 %v407, %v621
        %v651 = vmul.f32 %v408, %v621
        %v652 = vmul.f32 %v409, %v621
        %v653 = vmul.f32 %v410, %v621
        %v654 = vlaneseq
        %v655 = vshrl.u32 %v654, 7
        %v656 = vsub.s32 0, %v655
        %v657 = vrot.slane %v617, %v656
        %v658 = vadd.f32 %v622, %v657
        %v659 = vadd.f32 %v623, %v657
        %v660 = vadd.f32 %v624, %v657
        %v661 = vadd.f32 %v625, %v657
        %v662 = vadd.f32 %v626, %v657
        %v663 = vadd.f32 %v627, %v657
        %v664 = vadd.f32 %v628, %v657
        %v665 = vadd.f32 %v629, %v657
        %v666 = vadd.f32 %v630, %v657
        %v667 = vadd.f32 %v631, %v657
        %v668 = vadd.f32 %v632, %v657
        %v669 = vadd.f32 %v633, %v657
        %v670 = vadd.f32 %v634, %v657
        %v671 = vadd.f32 %v635, %v657
        %v672 = vadd.f32 %v636, %v657
        %v673 = vadd.f32 %v637, %v657
        %v674 = vadd.f32 %v638, %v657
        %v675 = vadd.f32 %v639, %v657
        %v676 = vadd.f32 %v640, %v657
        %v677 = vadd.f32 %v641, %v657
        %v678 = vadd.f32 %v642, %v657
        %v679 = vadd.f32 %v643, %v657
        %v680 = vadd.f32 %v644, %v657
        %v681 = vadd.f32 %v645, %v657
        %v682 = vadd.f32 %v646, %v657
        %v683 = vadd.f32 %v647, %v657
        %v684 = vadd.f32 %v648, %v657
        %v685 = vadd.f32 %v649, %v657
        %v686 = vadd.f32 %v650, %v657
        %v687 = vadd.f32 %v651, %v657
        %v688 = vadd.f32 %v652, %v657
        %v689 = vadd.f32 %v653, %v657
        %v690 = vpack.c.bf16 %v659, %v658
        %v691 = vpack.c.bf16 %v661, %v660
        %v692 = vpack.c.bf16 %v663, %v662
        %v693 = vpack.c.bf16 %v665, %v664
        %v694 = vpack.c.bf16 %v667, %v666
        %v695 = vpack.c.bf16 %v669, %v668
        %v696 = vpack.c.bf16 %v671, %v670
        %v697 = vpack.c.bf16 %v673, %v672
        %v698 = vpack.c.bf16 %v675, %v674
        %v699 = vpack.c.bf16 %v677, %v676
        %v700 = vpack.c.bf16 %v679, %v678
        %v701 = vpack.c.bf16 %v681, %v680
        %v702 = vpack.c.bf16 %v683, %v682
        %v703 = vpack.c.bf16 %v685, %v684
        %v704 = vpack.c.bf16 %v687, %v686
        %v705 = vpack.c.bf16 %v689, %v688
        %v706 = vld [vmem:[#allocation7] sm:$0xff]
        %v707 = vld [vmem:[#allocation7 + $0x8] sm:$0xf]
        %v708 = vld [vmem:[#allocation7 + $0xc] sm:$0xff]
        %v709 = vld [vmem:[#allocation7 + $0x14] sm:$0xf]
        %v710 = vld [vmem:[#allocation7 + $0x18] sm:$0xff]
        %v711 = vld [vmem:[#allocation7 + $0x20] sm:$0xf]
        %v712 = vld [vmem:[#allocation7 + $0x24] sm:$0xff]
        %v713 = vld [vmem:[#allocation7 + $0x2c] sm:$0xf]
        %v714 = vld [vmem:[#allocation7 + $0x30] sm:$0xff]
        %v715 = vld [vmem:[#allocation7 + $0x38] sm:$0xf]
        %v716 = vld [vmem:[#allocation7 + $0x3c] sm:$0xff]
        %v717 = vld [vmem:[#allocation7 + $0x44] sm:$0xf]
        %v718 = vld [vmem:[#allocation7 + $0x48] sm:$0xff]
        %v719 = vld [vmem:[#allocation7 + $0x50] sm:$0xf]
        %v720 = vld [vmem:[#allocation7 + $0x54] sm:$0xff]
        %v721 = vld [vmem:[#allocation7 + $0x5c] sm:$0xf]
        %v722 = vld [vmem:[#allocation7 + $0x60] sm:$0xff]
        %v723 = vld [vmem:[#allocation7 + $0x68] sm:$0xf]
        %v724 = vld [vmem:[#allocation7 + $0x6c] sm:$0xff]
        %v725 = vld [vmem:[#allocation7 + $0x74] sm:$0xf]
        %v726 = vld [vmem:[#allocation7 + $0x78] sm:$0xff]
        %v727 = vld [vmem:[#allocation7 + $0x80] sm:$0xf]
        %v728 = vld [vmem:[#allocation7 + $0x84] sm:$0xff]
        %v729 = vld [vmem:[#allocation7 + $0x8c] sm:$0xf]
        %v730 = vld [vmem:[#allocation7 + $0x90] sm:$0xff]
        %v731 = vld [vmem:[#allocation7 + $0x98] sm:$0xf]
        %v732 = vld [vmem:[#allocation7 + $0x9c] sm:$0xff]
        %v733 = vld [vmem:[#allocation7 + $0xa4] sm:$0xf]
        %v734 = vld [vmem:[#allocation7 + $0xa8] sm:$0xff]
        %v735 = vld [vmem:[#allocation7 + $0xb0] sm:$0xf]
        %v736 = vld [vmem:[#allocation7 + $0xb4] sm:$0xff]
        %v737 = vld [vmem:[#allocation7 + $0xbc] sm:$0xf]
        %v738 = vld [vmem:[%s3] sm:$0x7]
        %v740 = vlaneseq
        %v741 = vshrl.u32 %v740, 7
        %v742 = vsub.s32 0, %v741
        %v743 = vrot.slane %v738, %v742
        %v744 = vlaneseq
        %v745 = vshrl.u32 %v744, 7
        %v746 = vsub.s32 1, %v745
        %v747 = vrot.slane %v738, %v746
        %v748 = vlaneseq
        %v749 = vshrl.u32 %v748, 7
        %v750 = vsub.s32 2, %v749
        %v751 = vrot.slane %v738, %v750
        %v787 = vunpack.c.l.b16 %v706
        %v788 = vunpack.c.h.b16 %v706
        %v789 = vunpack.c.l.b16 %v707
        %v790 = vunpack.c.l.b16 %v708
        %v791 = vunpack.c.h.b16 %v708
        %v792 = vunpack.c.l.b16 %v709
        %v793 = vunpack.c.l.b16 %v710
        %v794 = vunpack.c.h.b16 %v710
        %v795 = vunpack.c.l.b16 %v711
        %v796 = vunpack.c.l.b16 %v712
        %v797 = vunpack.c.h.b16 %v712
        %v798 = vunpack.c.l.b16 %v713
        %v799 = vunpack.c.l.b16 %v714
        %v800 = vunpack.c.h.b16 %v714
        %v801 = vunpack.c.l.b16 %v715
        %v802 = vunpack.c.l.b16 %v716
        %v803 = vunpack.c.h.b16 %v716
        %v804 = vunpack.c.l.b16 %v717
        %v805 = vunpack.c.l.b16 %v718
        %v806 = vunpack.c.h.b16 %v718
        %v807 = vunpack.c.l.b16 %v719
        %v808 = vunpack.c.l.b16 %v720
        %v809 = vunpack.c.h.b16 %v720
        %v810 = vunpack.c.l.b16 %v721
        %v811 = vunpack.c.l.b16 %v722
        %v812 = vunpack.c.h.b16 %v722
        %v813 = vunpack.c.l.b16 %v723
        %v814 = vunpack.c.l.b16 %v724
        %v815 = vunpack.c.h.b16 %v724
        %v816 = vunpack.c.l.b16 %v725
        %v817 = vunpack.c.l.b16 %v726
        %v818 = vunpack.c.h.b16 %v726
        %v819 = vunpack.c.l.b16 %v727
        %v820 = vunpack.c.l.b16 %v728
        %v821 = vunpack.c.h.b16 %v728
        %v822 = vunpack.c.l.b16 %v729
        %v823 = vunpack.c.l.b16 %v730
        %v824 = vunpack.c.h.b16 %v730
        %v825 = vunpack.c.l.b16 %v731
        %v826 = vunpack.c.l.b16 %v732
        %v827 = vunpack.c.h.b16 %v732
        %v828 = vunpack.c.l.b16 %v733
        %v829 = vunpack.c.l.b16 %v734
        %v830 = vunpack.c.h.b16 %v734
        %v831 = vunpack.c.l.b16 %v735
        %v832 = vunpack.c.l.b16 %v736
        %v833 = vunpack.c.h.b16 %v736
        %v834 = vunpack.c.l.b16 %v737
        %v835 = vpack.c.b16 %v790, %v787
        %v836 = vpack.c.b16 %v791, %v788
        %v837 = vpack.c.b16 %v792, %v789
        %v838 = vpack.c.b16 %v796, %v793
        %v839 = vpack.c.b16 %v797, %v794
        %v840 = vpack.c.b16 %v798, %v795
        %v841 = vpack.c.b16 %v802, %v799
        %v842 = vpack.c.b16 %v803, %v800
        %v843 = vpack.c.b16 %v804, %v801
        %v844 = vpack.c.b16 %v808, %v805
        %v845 = vpack.c.b16 %v809, %v806
        %v846 = vpack.c.b16 %v810, %v807
        %v847 = vpack.c.b16 %v814, %v811
        %v848 = vpack.c.b16 %v815, %v812
        %v849 = vpack.c.b16 %v816, %v813
        %v850 = vpack.c.b16 %v820, %v817
        %v851 = vpack.c.b16 %v821, %v818
        %v852 = vpack.c.b16 %v822, %v819
        %v853 = vpack.c.b16 %v826, %v823
        %v854 = vpack.c.b16 %v827, %v824
        %v855 = vpack.c.b16 %v828, %v825
        %v856 = vpack.c.b16 %v832, %v829
        %v857 = vpack.c.b16 %v833, %v830
        %v858 = vpack.c.b16 %v834, %v831
        %883 = vmatprep.subr.bf16.mxu0 %v857
        %884 = vmatpush1.bf16.msra.mxu0 %v856
        %885 = vmatprep.subr.bf16.mxu0 %v854
        %886 = vmatpush1.bf16.msra.mxu0 %v853
        %887 = vmatprep.subr.bf16.mxu0 %v851
        %888 = vmatpush1.bf16.msra.mxu0 %v850
        %889 = vmatprep.subr.bf16.mxu0 %v848
        %890 = vmatpush1.bf16.msra.mxu0 %v847
        %891 = vmatprep.subr.bf16.mxu0 %v845
        %892 = vmatpush1.bf16.msra.mxu0 %v844
        %893 = vmatprep.subr.bf16.mxu0 %v842
        %894 = vmatpush1.bf16.msra.mxu0 %v841
        %895 = vmatprep.subr.bf16.mxu0 %v839
        %896 = vmatpush1.bf16.msra.mxu0 %v838
        %897 = vmatprep.subr.bf16.mxu0 %v836
        %898 = vmatpush1.bf16.msra.mxu0 %v835
        %899 = vmatprep.subr.bf16.mxu0 0
        %900 = vmatpush2.bf16.msra.mxu0 0
        %901 = vmatprep.subr.bf16.mxu0 0
        %902 = vmatpush2.bf16.msra.mxu0 0
        %903 = vmatprep.subr.bf16.mxu0 0
        %904 = vmatpush2.bf16.msra.mxu0 0
        %905 = vmatprep.subr.bf16.mxu0 0
        %906 = vmatpush2.bf16.msra.mxu0 0
        %907 = vmatprep.subr.bf16.mxu0 0
        %908 = vmatpush2.bf16.msra.mxu0 0
        %909 = vmatprep.subr.bf16.mxu0 0
        %910 = vmatpush2.bf16.msra.mxu0 0
        %911 = vmatprep.subr.bf16.mxu0 0
        %912 = vmatpush2.bf16.msra.mxu0 0
        %913 = vmatprep.subr.bf16.mxu0 0
        %914 = vmatpush2.bf16.msra.mxu0 0
        %915 = vmatprep.mubr.bf16.mxu0 0
        %916 = vmatmul.mubr.bf16.gmra.mxu0 %v690
        %v917 = vpop.f32.mrf.mxu0
        %v918 = vadd.f32 %v743, %v917
        %v919 = vpop.f32.mrf.mxu0
        %v920 = vadd.f32 %v747, %v919
        %v921 = vpop.f32.mrf.mxu0
        %v922 = vadd.f32 %v743, %v921
        %v923 = vpop.f32.mrf.mxu0
        %v924 = vadd.f32 %v747, %v923
        %925 = vmatprep.mubr.bf16.mxu0 0
        %926 = vmatmul.mubr.bf16.gmra.mxu0 %v691
        %v927 = vpop.f32.mrf.mxu0
        %v928 = vadd.f32 %v743, %v927
        %v929 = vpop.f32.mrf.mxu0
        %v930 = vadd.f32 %v747, %v929
        %v931 = vpop.f32.mrf.mxu0
        %v932 = vadd.f32 %v743, %v931
        %v933 = vpop.f32.mrf.mxu0
        %v934 = vadd.f32 %v747, %v933
        %935 = vmatprep.mubr.bf16.mxu0 0
        %936 = vmatmul.mubr.bf16.gmra.mxu0 %v692
        %v937 = vpop.f32.mrf.mxu0
        %v938 = vadd.f32 %v743, %v937
        %v939 = vpop.f32.mrf.mxu0
        %v940 = vadd.f32 %v747, %v939
        %v941 = vpop.f32.mrf.mxu0
        %v942 = vadd.f32 %v743, %v941
        %v943 = vpop.f32.mrf.mxu0
        %v944 = vadd.f32 %v747, %v943
        %945 = vmatprep.mubr.bf16.mxu0 0
        %946 = vmatmul.mubr.bf16.gmra.mxu0 %v693
        %v947 = vpop.f32.mrf.mxu0
        %v948 = vadd.f32 %v743, %v947
        %v949 = vpop.f32.mrf.mxu0
        %v950 = vadd.f32 %v747, %v949
        %v951 = vpop.f32.mrf.mxu0
        %v952 = vadd.f32 %v743, %v951
        %v953 = vpop.f32.mrf.mxu0
        %v954 = vadd.f32 %v747, %v953
        %955 = vmatprep.mubr.bf16.mxu0 0
        %956 = vmatmul.mubr.bf16.gmra.mxu0 %v694
        %v957 = vpop.f32.mrf.mxu0
        %v958 = vadd.f32 %v743, %v957
        %v959 = vpop.f32.mrf.mxu0
        %v960 = vadd.f32 %v747, %v959
        %v961 = vpop.f32.mrf.mxu0
        %v962 = vadd.f32 %v743, %v961
        %v963 = vpop.f32.mrf.mxu0
        %v964 = vadd.f32 %v747, %v963
        %965 = vmatprep.mubr.bf16.mxu0 0
        %966 = vmatmul.mubr.bf16.gmra.mxu0 %v695
        %v967 = vpop.f32.mrf.mxu0
        %v968 = vadd.f32 %v743, %v967
        %v969 = vpop.f32.mrf.mxu0
        %v970 = vadd.f32 %v747, %v969
        %v971 = vpop.f32.mrf.mxu0
        %v972 = vadd.f32 %v743, %v971
        %v973 = vpop.f32.mrf.mxu0
        %v974 = vadd.f32 %v747, %v973
        %975 = vmatprep.mubr.bf16.mxu0 0
        %976 = vmatmul.mubr.bf16.gmra.mxu0 %v696
        %v977 = vpop.f32.mrf.mxu0
        %v978 = vadd.f32 %v743, %v977
        %v979 = vpop.f32.mrf.mxu0
        %v980 = vadd.f32 %v747, %v979
        %v981 = vpop.f32.mrf.mxu0
        %v982 = vadd.f32 %v743, %v981
        %v983 = vpop.f32.mrf.mxu0
        %v984 = vadd.f32 %v747, %v983
        %985 = vmatprep.mubr.bf16.mxu0 0
        %986 = vmatmul.mubr.bf16.gmra.mxu0 %v697
        %v987 = vpop.f32.mrf.mxu0
        %v988 = vadd.f32 %v743, %v987
        %v989 = vpop.f32.mrf.mxu0
        %v990 = vadd.f32 %v747, %v989
        %v991 = vpop.f32.mrf.mxu0
        %v992 = vadd.f32 %v743, %v991
        %v993 = vpop.f32.mrf.mxu0
        %v994 = vadd.f32 %v747, %v993
        %995 = vmatprep.mubr.bf16.mxu0 0
        %996 = vmatmul.mubr.bf16.gmra.mxu0 %v698
        %v997 = vpop.f32.mrf.mxu0
        %v998 = vadd.f32 %v743, %v997
        %v999 = vpop.f32.mrf.mxu0
        %v1000 = vadd.f32 %v747, %v999
        %v1001 = vpop.f32.mrf.mxu0
        %v1002 = vadd.f32 %v743, %v1001
        %v1003 = vpop.f32.mrf.mxu0
        %v1004 = vadd.f32 %v747, %v1003
        %1005 = vmatprep.mubr.bf16.mxu0 0
        %1006 = vmatmul.mubr.bf16.gmra.mxu0 %v699
        %v1007 = vpop.f32.mrf.mxu0
        %v1008 = vadd.f32 %v743, %v1007
        %v1009 = vpop.f32.mrf.mxu0
        %v1010 = vadd.f32 %v747, %v1009
        %v1011 = vpop.f32.mrf.mxu0
        %v1012 = vadd.f32 %v743, %v1011
        %v1013 = vpop.f32.mrf.mxu0
        %v1014 = vadd.f32 %v747, %v1013
        %1015 = vmatprep.mubr.bf16.mxu0 0
        %1016 = vmatmul.mubr.bf16.gmra.mxu0 %v700
        %v1017 = vpop.f32.mrf.mxu0
        %v1018 = vadd.f32 %v743, %v1017
        %v1019 = vpop.f32.mrf.mxu0
        %v1020 = vadd.f32 %v747, %v1019
        %v1021 = vpop.f32.mrf.mxu0
        %v1022 = vadd.f32 %v743, %v1021
        %v1023 = vpop.f32.mrf.mxu0
        %v1024 = vadd.f32 %v747, %v1023
        %1025 = vmatprep.mubr.bf16.mxu0 0
        %1026 = vmatmul.mubr.bf16.gmra.mxu0 %v701
        %v1027 = vpop.f32.mrf.mxu0
        %v1028 = vadd.f32 %v743, %v1027
        %v1029 = vpop.f32.mrf.mxu0
        %v1030 = vadd.f32 %v747, %v1029
        %v1031 = vpop.f32.mrf.mxu0
        %v1032 = vadd.f32 %v743, %v1031
        %v1033 = vpop.f32.mrf.mxu0
        %v1034 = vadd.f32 %v747, %v1033
        %1035 = vmatprep.mubr.bf16.mxu0 0
        %1036 = vmatmul.mubr.bf16.gmra.mxu0 %v702
        %v1037 = vpop.f32.mrf.mxu0
        %v1038 = vadd.f32 %v743, %v1037
        %v1039 = vpop.f32.mrf.mxu0
        %v1040 = vadd.f32 %v747, %v1039
        %v1041 = vpop.f32.mrf.mxu0
        %v1042 = vadd.f32 %v743, %v1041
        %v1043 = vpop.f32.mrf.mxu0
        %v1044 = vadd.f32 %v747, %v1043
        %1045 = vmatprep.mubr.bf16.mxu0 0
        %1046 = vmatmul.mubr.bf16.gmra.mxu0 %v703
        %v1047 = vpop.f32.mrf.mxu0
        %v1048 = vadd.f32 %v743, %v1047
        %v1049 = vpop.f32.mrf.mxu0
        %v1050 = vadd.f32 %v747, %v1049
        %v1051 = vpop.f32.mrf.mxu0
        %v1052 = vadd.f32 %v743, %v1051
        %v1053 = vpop.f32.mrf.mxu0
        %v1054 = vadd.f32 %v747, %v1053
        %1055 = vmatprep.mubr.bf16.mxu0 0
        %1056 = vmatmul.mubr.bf16.gmra.mxu0 %v704
        %v1057 = vpop.f32.mrf.mxu0
        %v1058 = vadd.f32 %v743, %v1057
        %v1059 = vpop.f32.mrf.mxu0
        %v1060 = vadd.f32 %v747, %v1059
        %v1061 = vpop.f32.mrf.mxu0
        %v1062 = vadd.f32 %v743, %v1061
        %v1063 = vpop.f32.mrf.mxu0
        %v1064 = vadd.f32 %v747, %v1063
        %1065 = vmatprep.mubr.bf16.mxu0 0
        %1066 = vmatmul.mubr.bf16.gmra.mxu0 %v705
        %v1067 = vpop.f32.mrf.mxu0
        %v1068 = vadd.f32 %v743, %v1067
        %v1069 = vpop.f32.mrf.mxu0
        %v1070 = vadd.f32 %v747, %v1069
        %v1071 = vpop.f32.mrf.mxu0
        %v1072 = vadd.f32 %v743, %v1071
        %v1073 = vpop.f32.mrf.mxu0
        %v1074 = vadd.f32 %v747, %v1073
        %1075 = vdwg.mxu0
        %1076 = vmatprep.subr.bf16.mxu0 0
        %1077 = vmatpush1.bf16.msra.mxu0 %v858
        %1078 = vmatprep.subr.bf16.mxu0 0
        %1079 = vmatpush1.bf16.msra.mxu0 %v855
        %1080 = vmatprep.subr.bf16.mxu0 0
        %1081 = vmatpush1.bf16.msra.mxu0 %v852
        %1082 = vmatprep.subr.bf16.mxu0 0
        %1083 = vmatpush1.bf16.msra.mxu0 %v849
        %1084 = vmatprep.subr.bf16.mxu0 0
        %1085 = vmatpush1.bf16.msra.mxu0 %v846
        %1086 = vmatprep.subr.bf16.mxu0 0
        %1087 = vmatpush1.bf16.msra.mxu0 %v843
        %1088 = vmatprep.subr.bf16.mxu0 0
        %1089 = vmatpush1.bf16.msra.mxu0 %v840
        %1090 = vmatprep.subr.bf16.mxu0 0
        %1091 = vmatpush1.bf16.msra.mxu0 %v837
        %1092 = vmatprep.subr.bf16.mxu0 0
        %1093 = vmatpush2.bf16.msra.mxu0 0
        %1094 = vmatprep.subr.bf16.mxu0 0
        %1095 = vmatpush2.bf16.msra.mxu0 0
        %1096 = vmatprep.subr.bf16.mxu0 0
        %1097 = vmatpush2.bf16.msra.mxu0 0
        %1098 = vmatprep.subr.bf16.mxu0 0
        %1099 = vmatpush2.bf16.msra.mxu0 0
        %1100 = vmatprep.subr.bf16.mxu0 0
        %1101 = vmatpush2.bf16.msra.mxu0 0
        %1102 = vmatprep.subr.bf16.mxu0 0
        %1103 = vmatpush2.bf16.msra.mxu0 0
        %1104 = vmatprep.subr.bf16.mxu0 0
        %1105 = vmatpush2.bf16.msra.mxu0 0
        %1106 = vmatprep.subr.bf16.mxu0 0
        %1107 = vmatpush2.bf16.msra.mxu0 0
        %1108 = vmatprep.mubr.bf16.mxu0 0
        %1109 = vmatmul.mubr.bf16.gmra.mxu0 %v690
        %v1110 = vpop.f32.mrf.mxu0
        %v1111 = vadd.f32 %v751, %v1110
        %v1112 = vpop.f32.mrf.mxu0
        %v1113 = vpop.f32.mrf.mxu0
        %v1114 = vadd.f32 %v751, %v1113
        %v1115 = vpop.f32.mrf.mxu0
        %1116 = vmatprep.mubr.bf16.mxu0 0
        %1117 = vmatmul.mubr.bf16.gmra.mxu0 %v691
        %v1118 = vpop.f32.mrf.mxu0
        %v1119 = vadd.f32 %v751, %v1118
        %v1120 = vpop.f32.mrf.mxu0
        %v1121 = vpop.f32.mrf.mxu0
        %v1122 = vadd.f32 %v751, %v1121
        %v1123 = vpop.f32.mrf.mxu0
        %1124 = vmatprep.mubr.bf16.mxu0 0
        %1125 = vmatmul.mubr.bf16.gmra.mxu0 %v692
        %v1126 = vpop.f32.mrf.mxu0
        %v1127 = vadd.f32 %v751, %v1126
        %v1128 = vpop.f32.mrf.mxu0
        %v1129 = vpop.f32.mrf.mxu0
        %v1130 = vadd.f32 %v751, %v1129
        %v1131 = vpop.f32.mrf.mxu0
        %1132 = vmatprep.mubr.bf16.mxu0 0
        %1133 = vmatmul.mubr.bf16.gmra.mxu0 %v693
        %v1134 = vpop.f32.mrf.mxu0
        %v1135 = vadd.f32 %v751, %v1134
        %v1136 = vpop.f32.mrf.mxu0
        %v1137 = vpop.f32.mrf.mxu0
        %v1138 = vadd.f32 %v751, %v1137
        %v1139 = vpop.f32.mrf.mxu0
        %1140 = vmatprep.mubr.bf16.mxu0 0
        %1141 = vmatmul.mubr.bf16.gmra.mxu0 %v694
        %v1142 = vpop.f32.mrf.mxu0
        %v1143 = vadd.f32 %v751, %v1142
        %v1144 = vpop.f32.mrf.mxu0
        %v1145 = vpop.f32.mrf.mxu0
        %v1146 = vadd.f32 %v751, %v1145
        %v1147 = vpop.f32.mrf.mxu0
        %1148 = vmatprep.mubr.bf16.mxu0 0
        %1149 = vmatmul.mubr.bf16.gmra.mxu0 %v695
        %v1150 = vpop.f32.mrf.mxu0
        %v1151 = vadd.f32 %v751, %v1150
        %v1152 = vpop.f32.mrf.mxu0
        %v1153 = vpop.f32.mrf.mxu0
        %v1154 = vadd.f32 %v751, %v1153
        %v1155 = vpop.f32.mrf.mxu0
        %1156 = vmatprep.mubr.bf16.mxu0 0
        %1157 = vmatmul.mubr.bf16.gmra.mxu0 %v696
        %v1158 = vpop.f32.mrf.mxu0
        %v1159 = vadd.f32 %v751, %v1158
        %v1160 = vpop.f32.mrf.mxu0
        %v1161 = vpop.f32.mrf.mxu0
        %v1162 = vadd.f32 %v751, %v1161
        %v1163 = vpop.f32.mrf.mxu0
        %1164 = vmatprep.mubr.bf16.mxu0 0
        %1165 = vmatmul.mubr.bf16.gmra.mxu0 %v697
        %v1166 = vpop.f32.mrf.mxu0
        %v1167 = vadd.f32 %v751, %v1166
        %v1168 = vpop.f32.mrf.mxu0
        %v1169 = vpop.f32.mrf.mxu0
        %v1170 = vadd.f32 %v751, %v1169
        %v1171 = vpop.f32.mrf.mxu0
        %1172 = vmatprep.mubr.bf16.mxu0 0
        %1173 = vmatmul.mubr.bf16.gmra.mxu0 %v698
        %v1174 = vpop.f32.mrf.mxu0
        %v1175 = vadd.f32 %v751, %v1174
        %v1176 = vpop.f32.mrf.mxu0
        %v1177 = vpop.f32.mrf.mxu0
        %v1178 = vadd.f32 %v751, %v1177
        %v1179 = vpop.f32.mrf.mxu0
        %1180 = vmatprep.mubr.bf16.mxu0 0
        %1181 = vmatmul.mubr.bf16.gmra.mxu0 %v699
        %v1182 = vpop.f32.mrf.mxu0
        %v1183 = vadd.f32 %v751, %v1182
        %v1184 = vpop.f32.mrf.mxu0
        %v1185 = vpop.f32.mrf.mxu0
        %v1186 = vadd.f32 %v751, %v1185
        %v1187 = vpop.f32.mrf.mxu0
        %1188 = vmatprep.mubr.bf16.mxu0 0
        %1189 = vmatmul.mubr.bf16.gmra.mxu0 %v700
        %v1190 = vpop.f32.mrf.mxu0
        %v1191 = vadd.f32 %v751, %v1190
        %v1192 = vpop.f32.mrf.mxu0
        %v1193 = vpop.f32.mrf.mxu0
        %v1194 = vadd.f32 %v751, %v1193
        %v1195 = vpop.f32.mrf.mxu0
        %1196 = vmatprep.mubr.bf16.mxu0 0
        %1197 = vmatmul.mubr.bf16.gmra.mxu0 %v701
        %v1198 = vpop.f32.mrf.mxu0
        %v1199 = vadd.f32 %v751, %v1198
        %v1200 = vpop.f32.mrf.mxu0
        %v1201 = vpop.f32.mrf.mxu0
        %v1202 = vadd.f32 %v751, %v1201
        %v1203 = vpop.f32.mrf.mxu0
        %1204 = vmatprep.mubr.bf16.mxu0 0
        %1205 = vmatmul.mubr.bf16.gmra.mxu0 %v702
        %v1206 = vpop.f32.mrf.mxu0
        %v1207 = vadd.f32 %v751, %v1206
        %v1208 = vpop.f32.mrf.mxu0
        %v1209 = vpop.f32.mrf.mxu0
        %v1210 = vadd.f32 %v751, %v1209
        %v1211 = vpop.f32.mrf.mxu0
        %1212 = vmatprep.mubr.bf16.mxu0 0
        %1213 = vmatmul.mubr.bf16.gmra.mxu0 %v703
        %v1214 = vpop.f32.mrf.mxu0
        %v1215 = vadd.f32 %v751, %v1214
        %v1216 = vpop.f32.mrf.mxu0
        %v1217 = vpop.f32.mrf.mxu0
        %v1218 = vadd.f32 %v751, %v1217
        %v1219 = vpop.f32.mrf.mxu0
        %1220 = vmatprep.mubr.bf16.mxu0 0
        %1221 = vmatmul.mubr.bf16.gmra.mxu0 %v704
        %v1222 = vpop.f32.mrf.mxu0
        %v1223 = vadd.f32 %v751, %v1222
        %v1224 = vpop.f32.mrf.mxu0
        %v1225 = vpop.f32.mrf.mxu0
        %v1226 = vadd.f32 %v751, %v1225
        %v1227 = vpop.f32.mrf.mxu0
        %1228 = vmatprep.mubr.bf16.mxu0 0
        %1229 = vmatmul.mubr.bf16.gmra.mxu0 %v705
        %v1230 = vpop.f32.mrf.mxu0
        %v1231 = vadd.f32 %v751, %v1230
        %v1232 = vpop.f32.mrf.mxu0
        %v1233 = vpop.f32.mrf.mxu0
        %v1234 = vadd.f32 %v751, %v1233
        %v1235 = vpop.f32.mrf.mxu0
        %1236 = vdwg.mxu0
        %v1237 = vpack.c.bf16 %v922, %v918
        %v1238 = vpack.c.bf16 %v932, %v928
        %v1239 = vpack.c.bf16 %v942, %v938
        %v1240 = vpack.c.bf16 %v952, %v948
        %v1241 = vpack.c.bf16 %v962, %v958
        %v1242 = vpack.c.bf16 %v972, %v968
        %v1243 = vpack.c.bf16 %v982, %v978
        %v1244 = vpack.c.bf16 %v992, %v988
        %v1245 = vpack.c.bf16 %v1002, %v998
        %v1246 = vpack.c.bf16 %v1012, %v1008
        %v1247 = vpack.c.bf16 %v1022, %v1018
        %v1248 = vpack.c.bf16 %v1032, %v1028
        %v1249 = vpack.c.bf16 %v1042, %v1038
        %v1250 = vpack.c.bf16 %v1052, %v1048
        %v1251 = vpack.c.bf16 %v1062, %v1058
        %v1252 = vpack.c.bf16 %v1072, %v1068
        %v1253 = vpack.c.bf16 %v924, %v920
        %v1254 = vpack.c.bf16 %v934, %v930
        %v1255 = vpack.c.bf16 %v944, %v940
        %v1256 = vpack.c.bf16 %v954, %v950
        %v1257 = vpack.c.bf16 %v964, %v960
        %v1258 = vpack.c.bf16 %v974, %v970
        %v1259 = vpack.c.bf16 %v984, %v980
        %v1260 = vpack.c.bf16 %v994, %v990
        %v1261 = vpack.c.bf16 %v1004, %v1000
        %v1262 = vpack.c.bf16 %v1014, %v1010
        %v1263 = vpack.c.bf16 %v1024, %v1020
        %v1264 = vpack.c.bf16 %v1034, %v1030
        %v1265 = vpack.c.bf16 %v1044, %v1040
        %v1266 = vpack.c.bf16 %v1054, %v1050
        %v1267 = vpack.c.bf16 %v1064, %v1060
        %v1268 = vpack.c.bf16 %v1074, %v1070
        %v1269 = vpack.c.bf16 %v1114, %v1111
        %v1270 = vpack.c.bf16 %v1122, %v1119
        %v1271 = vpack.c.bf16 %v1130, %v1127
        %v1272 = vpack.c.bf16 %v1138, %v1135
        %v1273 = vpack.c.bf16 %v1146, %v1143
        %v1274 = vpack.c.bf16 %v1154, %v1151
        %v1275 = vpack.c.bf16 %v1162, %v1159
        %v1276 = vpack.c.bf16 %v1170, %v1167
        %v1277 = vpack.c.bf16 %v1178, %v1175
        %v1278 = vpack.c.bf16 %v1186, %v1183
        %v1279 = vpack.c.bf16 %v1194, %v1191
        %v1280 = vpack.c.bf16 %v1202, %v1199
        %v1281 = vpack.c.bf16 %v1210, %v1207
        %v1282 = vpack.c.bf16 %v1218, %v1215
        %v1283 = vpack.c.bf16 %v1226, %v1223
        %v1284 = vpack.c.bf16 %v1234, %v1231
        %1285 = vmatprep.subr.bf16.mxu0 0
        %1286 = vmatpush1.bf16.xpose.msra.mxu0 %v1260
        %1287 = vmatprep.subr.bf16.mxu0 0
        %1288 = vmatpush1.bf16.xpose.msra.mxu0 %v1259
        %1289 = vmatprep.subr.bf16.mxu0 0
        %1290 = vmatpush1.bf16.xpose.msra.mxu0 %v1258
        %1291 = vmatprep.subr.bf16.mxu0 0
        %1292 = vmatpush1.bf16.xpose.msra.mxu0 %v1257
        %1293 = vmatprep.subr.bf16.mxu0 0
        %1294 = vmatpush1.bf16.xpose.msra.mxu0 %v1256
        %1295 = vmatprep.subr.bf16.mxu0 0
        %1296 = vmatpush1.bf16.xpose.msra.mxu0 %v1255
        %1297 = vmatprep.subr.bf16.mxu0 0
        %1298 = vmatpush1.bf16.xpose.msra.mxu0 %v1254
        %1299 = vmatprep.subr.bf16.mxu0 0
        %1300 = vmatpush1.bf16.xpose.msra.mxu0 %v1253
        %1301 = vmatprep.subr.bf16.mxu0 0
        %1302 = vmatpush2.bf16.xpose.msra.mxu0 %v1268
        %1303 = vmatprep.subr.bf16.mxu0 0
        %1304 = vmatpush2.bf16.xpose.msra.mxu0 %v1267
        %1305 = vmatprep.subr.bf16.mxu0 0
        %1306 = vmatpush2.bf16.xpose.msra.mxu0 %v1266
        %1307 = vmatprep.subr.bf16.mxu0 0
        %1308 = vmatpush2.bf16.xpose.msra.mxu0 %v1265
        %1309 = vmatprep.subr.bf16.mxu0 0
        %1310 = vmatpush2.bf16.xpose.msra.mxu0 %v1264
        %1311 = vmatprep.subr.bf16.mxu0 0
        %1312 = vmatpush2.bf16.xpose.msra.mxu0 %v1263
        %1313 = vmatprep.subr.bf16.mxu0 0
        %1314 = vmatpush2.bf16.xpose.msra.mxu0 %v1262
        %1315 = vmatprep.subr.bf16.mxu0 0
        %1316 = vmatpush2.bf16.xpose.msra.mxu0 %v1261
        %1317 = vmatprep.mubr.bf16.mxu0 0
        %1318 = vmatmul.mubr.bf16.gmra.mxu0 %v1237
        %v1319 = vpop.f32.mrf.mxu0
        %v1320 = vadd.f32 0.0, %v1319
        %v1321 = vpop.f32.mrf.mxu0
        %v1322 = vadd.f32 0.0, %v1321
        %v1323 = vpop.f32.mrf.mxu0
        %v1324 = vadd.f32 0.0, %v1323
        %v1325 = vpop.f32.mrf.mxu0
        %v1326 = vadd.f32 0.0, %v1325
        %1327 = vmatprep.mubr.bf16.mxu0 0
        %1328 = vmatmul.mubr.bf16.gmra.mxu0 %v1238
        %v1329 = vpop.f32.mrf.mxu0
        %v1330 = vadd.f32 0.0, %v1329
        %v1331 = vpop.f32.mrf.mxu0
        %v1332 = vadd.f32 0.0, %v1331
        %v1333 = vpop.f32.mrf.mxu0
        %v1334 = vadd.f32 0.0, %v1333
        %v1335 = vpop.f32.mrf.mxu0
        %v1336 = vadd.f32 0.0, %v1335
        %1337 = vmatprep.mubr.bf16.mxu0 0
        %1338 = vmatmul.mubr.bf16.gmra.mxu0 %v1239
        %v1339 = vpop.f32.mrf.mxu0
        %v1340 = vadd.f32 0.0, %v1339
        %v1341 = vpop.f32.mrf.mxu0
        %v1342 = vadd.f32 0.0, %v1341
        %v1343 = vpop.f32.mrf.mxu0
        %v1344 = vadd.f32 0.0, %v1343
        %v1345 = vpop.f32.mrf.mxu0
        %v1346 = vadd.f32 0.0, %v1345
        %1347 = vmatprep.mubr.bf16.mxu0 0
        %1348 = vmatmul.mubr.bf16.gmra.mxu0 %v1240
        %v1349 = vpop.f32.mrf.mxu0
        %v1350 = vadd.f32 0.0, %v1349
        %v1351 = vpop.f32.mrf.mxu0
        %v1352 = vadd.f32 0.0, %v1351
        %v1353 = vpop.f32.mrf.mxu0
        %v1354 = vadd.f32 0.0, %v1353
        %v1355 = vpop.f32.mrf.mxu0
        %v1356 = vadd.f32 0.0, %v1355
        %1357 = vmatprep.mubr.bf16.mxu0 0
        %1358 = vmatmul.mubr.bf16.gmra.mxu0 %v1241
        %v1359 = vpop.f32.mrf.mxu0
        %v1360 = vadd.f32 0.0, %v1359
        %v1361 = vpop.f32.mrf.mxu0
        %v1362 = vadd.f32 0.0, %v1361
        %v1363 = vpop.f32.mrf.mxu0
        %v1364 = vadd.f32 0.0, %v1363
        %v1365 = vpop.f32.mrf.mxu0
        %v1366 = vadd.f32 0.0, %v1365
        %1367 = vmatprep.mubr.bf16.mxu0 0
        %1368 = vmatmul.mubr.bf16.gmra.mxu0 %v1242
        %v1369 = vpop.f32.mrf.mxu0
        %v1370 = vadd.f32 0.0, %v1369
        %v1371 = vpop.f32.mrf.mxu0
        %v1372 = vadd.f32 0.0, %v1371
        %v1373 = vpop.f32.mrf.mxu0
        %v1374 = vadd.f32 0.0, %v1373
        %v1375 = vpop.f32.mrf.mxu0
        %v1376 = vadd.f32 0.0, %v1375
        %1377 = vmatprep.mubr.bf16.mxu0 0
        %1378 = vmatmul.mubr.bf16.gmra.mxu0 %v1243
        %v1379 = vpop.f32.mrf.mxu0
        %v1380 = vadd.f32 0.0, %v1379
        %v1381 = vpop.f32.mrf.mxu0
        %v1382 = vadd.f32 0.0, %v1381
        %v1383 = vpop.f32.mrf.mxu0
        %v1384 = vadd.f32 0.0, %v1383
        %v1385 = vpop.f32.mrf.mxu0
        %v1386 = vadd.f32 0.0, %v1385
        %1387 = vmatprep.mubr.bf16.mxu0 0
        %1388 = vmatmul.mubr.bf16.gmra.mxu0 %v1244
        %v1389 = vpop.f32.mrf.mxu0
        %v1390 = vadd.f32 0.0, %v1389
        %v1391 = vpop.f32.mrf.mxu0
        %v1392 = vadd.f32 0.0, %v1391
        %v1393 = vpop.f32.mrf.mxu0
        %v1394 = vadd.f32 0.0, %v1393
        %v1395 = vpop.f32.mrf.mxu0
        %v1396 = vadd.f32 0.0, %v1395
        %1397 = vmatprep.mubr.bf16.mxu0 0
        %1398 = vmatmul.mubr.bf16.gmra.mxu0 %v1245
        %v1399 = vpop.f32.mrf.mxu0
        %v1400 = vadd.f32 0.0, %v1399
        %v1401 = vpop.f32.mrf.mxu0
        %v1402 = vadd.f32 0.0, %v1401
        %v1403 = vpop.f32.mrf.mxu0
        %v1404 = vadd.f32 0.0, %v1403
        %v1405 = vpop.f32.mrf.mxu0
        %v1406 = vadd.f32 0.0, %v1405
        %1407 = vmatprep.mubr.bf16.mxu0 0
        %1408 = vmatmul.mubr.bf16.gmra.mxu0 %v1246
        %v1409 = vpop.f32.mrf.mxu0
        %v1410 = vadd.f32 0.0, %v1409
        %v1411 = vpop.f32.mrf.mxu0
        %v1412 = vadd.f32 0.0, %v1411
        %v1413 = vpop.f32.mrf.mxu0
        %v1414 = vadd.f32 0.0, %v1413
        %v1415 = vpop.f32.mrf.mxu0
        %v1416 = vadd.f32 0.0, %v1415
        %1417 = vmatprep.mubr.bf16.mxu0 0
        %1418 = vmatmul.mubr.bf16.gmra.mxu0 %v1247
        %v1419 = vpop.f32.mrf.mxu0
        %v1420 = vadd.f32 0.0, %v1419
        %v1421 = vpop.f32.mrf.mxu0
        %v1422 = vadd.f32 0.0, %v1421
        %v1423 = vpop.f32.mrf.mxu0
        %v1424 = vadd.f32 0.0, %v1423
        %v1425 = vpop.f32.mrf.mxu0
        %v1426 = vadd.f32 0.0, %v1425
        %1427 = vmatprep.mubr.bf16.mxu0 0
        %1428 = vmatmul.mubr.bf16.gmra.mxu0 %v1248
        %v1429 = vpop.f32.mrf.mxu0
        %v1430 = vadd.f32 0.0, %v1429
        %v1431 = vpop.f32.mrf.mxu0
        %v1432 = vadd.f32 0.0, %v1431
        %v1433 = vpop.f32.mrf.mxu0
        %v1434 = vadd.f32 0.0, %v1433
        %v1435 = vpop.f32.mrf.mxu0
        %v1436 = vadd.f32 0.0, %v1435
        %1437 = vmatprep.mubr.bf16.mxu0 0
        %1438 = vmatmul.mubr.bf16.gmra.mxu0 %v1249
        %v1439 = vpop.f32.mrf.mxu0
        %v1440 = vadd.f32 0.0, %v1439
        %v1441 = vpop.f32.mrf.mxu0
        %v1442 = vadd.f32 0.0, %v1441
        %v1443 = vpop.f32.mrf.mxu0
        %v1444 = vadd.f32 0.0, %v1443
        %v1445 = vpop.f32.mrf.mxu0
        %v1446 = vadd.f32 0.0, %v1445
        %1447 = vmatprep.mubr.bf16.mxu0 0
        %1448 = vmatmul.mubr.bf16.gmra.mxu0 %v1250
        %v1449 = vpop.f32.mrf.mxu0
        %v1450 = vadd.f32 0.0, %v1449
        %v1451 = vpop.f32.mrf.mxu0
        %v1452 = vadd.f32 0.0, %v1451
        %v1453 = vpop.f32.mrf.mxu0
        %v1454 = vadd.f32 0.0, %v1453
        %v1455 = vpop.f32.mrf.mxu0
        %v1456 = vadd.f32 0.0, %v1455
        %1457 = vmatprep.mubr.bf16.mxu0 0
        %1458 = vmatmul.mubr.bf16.gmra.mxu0 %v1251
        %v1459 = vpop.f32.mrf.mxu0
        %v1460 = vadd.f32 0.0, %v1459
        %v1461 = vpop.f32.mrf.mxu0
        %v1462 = vadd.f32 0.0, %v1461
        %v1463 = vpop.f32.mrf.mxu0
        %v1464 = vadd.f32 0.0, %v1463
        %v1465 = vpop.f32.mrf.mxu0
        %v1466 = vadd.f32 0.0, %v1465
        %1467 = vmatprep.mubr.bf16.mxu0 0
        %1468 = vmatmul.mubr.bf16.gmra.mxu0 %v1252
        %v1469 = vpop.f32.mrf.mxu0
        %v1470 = vadd.f32 0.0, %v1469
        %v1471 = vpop.f32.mrf.mxu0
        %v1472 = vadd.f32 0.0, %v1471
        %v1473 = vpop.f32.mrf.mxu0
        %v1474 = vadd.f32 0.0, %v1473
        %v1475 = vpop.f32.mrf.mxu0
        %v1476 = vadd.f32 0.0, %v1475
        %1477 = vdwg.mxu0
        %v1478 = vmax.f32 %v1320, %v1322
        %1479 = vmax.xlane.f32.xlu0 %v1478
        %v1480 = vpop.xlane.xlu0 %1479
        %v1481 = vmax.f32 %v1324, %v1326
        %1482 = vmax.xlane.f32.xlu0 %v1481
        %v1483 = vpop.xlane.xlu0 %1482
        %v1484 = vmax.f32 %v1330, %v1332
        %1485 = vmax.xlane.f32.xlu0 %v1484
        %v1486 = vpop.xlane.xlu0 %1485
        %v1487 = vmax.f32 %v1334, %v1336
        %1488 = vmax.xlane.f32.xlu0 %v1487
        %v1489 = vpop.xlane.xlu0 %1488
        %v1490 = vmax.f32 %v1340, %v1342
        %1491 = vmax.xlane.f32.xlu0 %v1490
        %v1492 = vpop.xlane.xlu0 %1491
        %v1493 = vmax.f32 %v1344, %v1346
        %1494 = vmax.xlane.f32.xlu0 %v1493
        %v1495 = vpop.xlane.xlu0 %1494
        %v1496 = vmax.f32 %v1350, %v1352
        %1497 = vmax.xlane.f32.xlu0 %v1496
        %v1498 = vpop.xlane.xlu0 %1497
        %v1499 = vmax.f32 %v1354, %v1356
        %1500 = vmax.xlane.f32.xlu0 %v1499
        %v1501 = vpop.xlane.xlu0 %1500
        %v1502 = vmax.f32 %v1360, %v1362
        %1503 = vmax.xlane.f32.xlu0 %v1502
        %v1504 = vpop.xlane.xlu0 %1503
        %v1505 = vmax.f32 %v1364, %v1366
        %1506 = vmax.xlane.f32.xlu0 %v1505
        %v1507 = vpop.xlane.xlu0 %1506
        %v1508 = vmax.f32 %v1370, %v1372
        %1509 = vmax.xlane.f32.xlu0 %v1508
        %v1510 = vpop.xlane.xlu0 %1509
        %v1511 = vmax.f32 %v1374, %v1376
        %1512 = vmax.xlane.f32.xlu0 %v1511
        %v1513 = vpop.xlane.xlu0 %1512
        %v1514 = vmax.f32 %v1380, %v1382
        %1515 = vmax.xlane.f32.xlu0 %v1514
        %v1516 = vpop.xlane.xlu0 %1515
        %v1517 = vmax.f32 %v1384, %v1386
        %1518 = vmax.xlane.f32.xlu0 %v1517
        %v1519 = vpop.xlane.xlu0 %1518
        %v1520 = vmax.f32 %v1390, %v1392
        %1521 = vmax.xlane.f32.xlu0 %v1520
        %v1522 = vpop.xlane.xlu0 %1521
        %v1523 = vmax.f32 %v1394, %v1396
        %1524 = vmax.xlane.f32.xlu0 %v1523
        %v1525 = vpop.xlane.xlu0 %1524
        %v1526 = vmax.f32 %v1400, %v1402
        %1527 = vmax.xlane.f32.xlu0 %v1526
        %v1528 = vpop.xlane.xlu0 %1527
        %v1529 = vmax.f32 %v1404, %v1406
        %1530 = vmax.xlane.f32.xlu0 %v1529
        %v1531 = vpop.xlane.xlu0 %1530
        %v1532 = vmax.f32 %v1410, %v1412
        %1533 = vmax.xlane.f32.xlu0 %v1532
        %v1534 = vpop.xlane.xlu0 %1533
        %v1535 = vmax.f32 %v1414, %v1416
        %1536 = vmax.xlane.f32.xlu0 %v1535
        %v1537 = vpop.xlane.xlu0 %1536
        %v1538 = vmax.f32 %v1420, %v1422
        %1539 = vmax.xlane.f32.xlu0 %v1538
        %v1540 = vpop.xlane.xlu0 %1539
        %v1541 = vmax.f32 %v1424, %v1426
        %1542 = vmax.xlane.f32.xlu0 %v1541
        %v1543 = vpop.xlane.xlu0 %1542
        %v1544 = vmax.f32 %v1430, %v1432
        %1545 = vmax.xlane.f32.xlu0 %v1544
        %v1546 = vpop.xlane.xlu0 %1545
        %v1547 = vmax.f32 %v1434, %v1436
        %1548 = vmax.xlane.f32.xlu0 %v1547
        %v1549 = vpop.xlane.xlu0 %1548
        %v1550 = vmax.f32 %v1440, %v1442
        %1551 = vmax.xlane.f32.xlu0 %v1550
        %v1552 = vpop.xlane.xlu0 %1551
        %v1553 = vmax.f32 %v1444, %v1446
        %1554 = vmax.xlane.f32.xlu0 %v1553
        %v1555 = vpop.xlane.xlu0 %1554
        %v1556 = vmax.f32 %v1450, %v1452
        %1557 = vmax.xlane.f32.xlu0 %v1556
        %v1558 = vpop.xlane.xlu0 %1557
        %v1559 = vmax.f32 %v1454, %v1456
        %1560 = vmax.xlane.f32.xlu0 %v1559
        %v1561 = vpop.xlane.xlu0 %1560
        %v1562 = vmax.f32 %v1460, %v1462
        %1563 = vmax.xlane.f32.xlu0 %v1562
        %v1564 = vpop.xlane.xlu0 %1563
        %v1565 = vmax.f32 %v1464, %v1466
        %1566 = vmax.xlane.f32.xlu0 %v1565
        %v1567 = vpop.xlane.xlu0 %1566
        %v1568 = vmax.f32 %v1470, %v1472
        %1569 = vmax.xlane.f32.xlu0 %v1568
        %v1570 = vpop.xlane.xlu0 %1569
        %v1571 = vmax.f32 %v1474, %v1476
        %1572 = vmax.xlane.f32.xlu0 %v1571
        %v1573 = vpop.xlane.xlu0 %1572
        %v1574 = vsub.f32 %v1320, %v1480
        %v1575 = vsub.f32 %v1322, %v1480
        %v1576 = vsub.f32 %v1324, %v1483
        %v1577 = vsub.f32 %v1326, %v1483
        %v1578 = vsub.f32 %v1330, %v1486
        %v1579 = vsub.f32 %v1332, %v1486
        %v1580 = vsub.f32 %v1334, %v1489
        %v1581 = vsub.f32 %v1336, %v1489
        %v1582 = vsub.f32 %v1340, %v1492
        %v1583 = vsub.f32 %v1342, %v1492
        %v1584 = vsub.f32 %v1344, %v1495
        %v1585 = vsub.f32 %v1346, %v1495
        %v1586 = vsub.f32 %v1350, %v1498
        %v1587 = vsub.f32 %v1352, %v1498
        %v1588 = vsub.f32 %v1354, %v1501
        %v1589 = vsub.f32 %v1356, %v1501
        %v1590 = vsub.f32 %v1360, %v1504
        %v1591 = vsub.f32 %v1362, %v1504
        %v1592 = vsub.f32 %v1364, %v1507
        %v1593 = vsub.f32 %v1366, %v1507
        %v1594 = vsub.f32 %v1370, %v1510
        %v1595 = vsub.f32 %v1372, %v1510
        %v1596 = vsub.f32 %v1374, %v1513
        %v1597 = vsub.f32 %v1376, %v1513
        %v1598 = vsub.f32 %v1380, %v1516
        %v1599 = vsub.f32 %v1382, %v1516
        %v1600 = vsub.f32 %v1384, %v1519
        %v1601 = vsub.f32 %v1386, %v1519
        %v1602 = vsub.f32 %v1390, %v1522
        %v1603 = vsub.f32 %v1392, %v1522
        %v1604 = vsub.f32 %v1394, %v1525
        %v1605 = vsub.f32 %v1396, %v1525
        %v1606 = vsub.f32 %v1400, %v1528
        %v1607 = vsub.f32 %v1402, %v1528
        %v1608 = vsub.f32 %v1404, %v1531
        %v1609 = vsub.f32 %v1406, %v1531
        %v1610 = vsub.f32 %v1410, %v1534
        %v1611 = vsub.f32 %v1412, %v1534
        %v1612 = vsub.f32 %v1414, %v1537
        %v1613 = vsub.f32 %v1416, %v1537
        %v1614 = vsub.f32 %v1420, %v1540
        %v1615 = vsub.f32 %v1422, %v1540
        %v1616 = vsub.f32 %v1424, %v1543
        %v1617 = vsub.f32 %v1426, %v1543
        %v1618 = vsub.f32 %v1430, %v1546
        %v1619 = vsub.f32 %v1432, %v1546
        %v1620 = vsub.f32 %v1434, %v1549
        %v1621 = vsub.f32 %v1436, %v1549
        %v1622 = vsub.f32 %v1440, %v1552
        %v1623 = vsub.f32 %v1442, %v1552
        %v1624 = vsub.f32 %v1444, %v1555
        %v1625 = vsub.f32 %v1446, %v1555
        %v1626 = vsub.f32 %v1450, %v1558
        %v1627 = vsub.f32 %v1452, %v1558
        %v1628 = vsub.f32 %v1454, %v1561
        %v1629 = vsub.f32 %v1456, %v1561
        %v1630 = vsub.f32 %v1460, %v1564
        %v1631 = vsub.f32 %v1462, %v1564
        %v1632 = vsub.f32 %v1464, %v1567
        %v1633 = vsub.f32 %v1466, %v1567
        %v1634 = vsub.f32 %v1470, %v1570
        %v1635 = vsub.f32 %v1472, %v1570
        %v1636 = vsub.f32 %v1474, %v1573
        %v1637 = vsub.f32 %v1476, %v1573
        %v1638 = vmul.f32 %v1574, 1.442695
        %v1639 = vpow.pop %v1638
        %v1640 = vmul.f32 %v1575, 1.442695
        %v1641 = vpow.pop %v1640
        %v1642 = vmul.f32 %v1576, 1.442695
        %v1643 = vpow.pop %v1642
        %v1644 = vmul.f32 %v1577, 1.442695
        %v1645 = vpow.pop %v1644
        %v1646 = vmul.f32 %v1578, 1.442695
        %v1647 = vpow.pop %v1646
        %v1648 = vmul.f32 %v1579, 1.442695
        %v1649 = vpow.pop %v1648
        %v1650 = vmul.f32 %v1580, 1.442695
        %v1651 = vpow.pop %v1650
        %v1652 = vmul.f32 %v1581, 1.442695
        %v1653 = vpow.pop %v1652
        %v1654 = vmul.f32 %v1582, 1.442695
        %v1655 = vpow.pop %v1654
        %v1656 = vmul.f32 %v1583, 1.442695
        %v1657 = vpow.pop %v1656
        %v1658 = vmul.f32 %v1584, 1.442695
        %v1659 = vpow.pop %v1658
        %v1660 = vmul.f32 %v1585, 1.442695
        %v1661 = vpow.pop %v1660
        %v1662 = vmul.f32 %v1586, 1.442695
        %v1663 = vpow.pop %v1662
        %v1664 = vmul.f32 %v1587, 1.442695
        %v1665 = vpow.pop %v1664
        %v1666 = vmul.f32 %v1588, 1.442695
        %v1667 = vpow.pop %v1666
        %v1668 = vmul.f32 %v1589, 1.442695
        %v1669 = vpow.pop %v1668
        %v1670 = vmul.f32 %v1590, 1.442695
        %v1671 = vpow.pop %v1670
        %v1672 = vmul.f32 %v1591, 1.442695
        %v1673 = vpow.pop %v1672
        %v1674 = vmul.f32 %v1592, 1.442695
        %v1675 = vpow.pop %v1674
        %v1676 = vmul.f32 %v1593, 1.442695
        %v1677 = vpow.pop %v1676
        %v1678 = vmul.f32 %v1594, 1.442695
        %v1679 = vpow.pop %v1678
        %v1680 = vmul.f32 %v1595, 1.442695
        %v1681 = vpow.pop %v1680
        %v1682 = vmul.f32 %v1596, 1.442695
        %v1683 = vpow.pop %v1682
        %v1684 = vmul.f32 %v1597, 1.442695
        %v1685 = vpow.pop %v1684
        %v1686 = vmul.f32 %v1598, 1.442695
        %v1687 = vpow.pop %v1686
        %v1688 = vmul.f32 %v1599, 1.442695
        %v1689 = vpow.pop %v1688
        %v1690 = vmul.f32 %v1600, 1.442695
        %v1691 = vpow.pop %v1690
        %v1692 = vmul.f32 %v1601, 1.442695
        %v1693 = vpow.pop %v1692
        %v1694 = vmul.f32 %v1602, 1.442695
        %v1695 = vpow.pop %v1694
        %v1696 = vmul.f32 %v1603, 1.442695
        %v1697 = vpow.pop %v1696
        %v1698 = vmul.f32 %v1604, 1.442695
        %v1699 = vpow.pop %v1698
        %v1700 = vmul.f32 %v1605, 1.442695
        %v1701 = vpow.pop %v1700
        %v1702 = vmul.f32 %v1606, 1.442695
        %v1703 = vpow.pop %v1702
        %v1704 = vmul.f32 %v1607, 1.442695
        %v1705 = vpow.pop %v1704
        %v1706 = vmul.f32 %v1608, 1.442695
        %v1707 = vpow.pop %v1706
        %v1708 = vmul.f32 %v1609, 1.442695
        %v1709 = vpow.pop %v1708
        %v1710 = vmul.f32 %v1610, 1.442695
        %v1711 = vpow.pop %v1710
        %v1712 = vmul.f32 %v1611, 1.442695
        %v1713 = vpow.pop %v1712
        %v1714 = vmul.f32 %v1612, 1.442695
        %v1715 = vpow.pop %v1714
        %v1716 = vmul.f32 %v1613, 1.442695
        %v1717 = vpow.pop %v1716
        %v1718 = vmul.f32 %v1614, 1.442695
        %v1719 = vpow.pop %v1718
        %v1720 = vmul.f32 %v1615, 1.442695
        %v1721 = vpow.pop %v1720
        %v1722 = vmul.f32 %v1616, 1.442695
        %v1723 = vpow.pop %v1722
        %v1724 = vmul.f32 %v1617, 1.442695
        %v1725 = vpow.pop %v1724
        %v1726 = vmul.f32 %v1618, 1.442695
        %v1727 = vpow.pop %v1726
        %v1728 = vmul.f32 %v1619, 1.442695
        %v1729 = vpow.pop %v1728
        %v1730 = vmul.f32 %v1620, 1.442695
        %v1731 = vpow.pop %v1730
        %v1732 = vmul.f32 %v1621, 1.442695
        %v1733 = vpow.pop %v1732
        %v1734 = vmul.f32 %v1622, 1.442695
        %v1735 = vpow.pop %v1734
        %v1736 = vmul.f32 %v1623, 1.442695
        %v1737 = vpow.pop %v1736
        %v1738 = vmul.f32 %v1624, 1.442695
        %v1739 = vpow.pop %v1738
        %v1740 = vmul.f32 %v1625, 1.442695
        %v1741 = vpow.pop %v1740
        %v1742 = vmul.f32 %v1626, 1.442695
        %v1743 = vpow.pop %v1742
        %v1744 = vmul.f32 %v1627, 1.442695
        %v1745 = vpow.pop %v1744
        %v1746 = vmul.f32 %v1628, 1.442695
        %v1747 = vpow.pop %v1746
        %v1748 = vmul.f32 %v1629, 1.442695
        %v1749 = vpow.pop %v1748
        %v1750 = vmul.f32 %v1630, 1.442695
        %v1751 = vpow.pop %v1750
        %v1752 = vmul.f32 %v1631, 1.442695
        %v1753 = vpow.pop %v1752
        %v1754 = vmul.f32 %v1632, 1.442695
        %v1755 = vpow.pop %v1754
        %v1756 = vmul.f32 %v1633, 1.442695
        %v1757 = vpow.pop %v1756
        %v1758 = vmul.f32 %v1634, 1.442695
        %v1759 = vpow.pop %v1758
        %v1760 = vmul.f32 %v1635, 1.442695
        %v1761 = vpow.pop %v1760
        %v1762 = vmul.f32 %v1636, 1.442695
        %v1763 = vpow.pop %v1762
        %v1764 = vmul.f32 %v1637, 1.442695
        %v1765 = vpow.pop %v1764
        %v1766 = vadd.f32 %v1639, %v1641
        %1767 = vadd.xlane.f32.xlu0 %v1766
        %v1768 = vpop.xlane.xlu0 %1767
        %v1769 = vadd.f32 %v1643, %v1645
        %1770 = vadd.xlane.f32.xlu0 %v1769
        %v1771 = vpop.xlane.xlu0 %1770
        %v1772 = vadd.f32 %v1647, %v1649
        %1773 = vadd.xlane.f32.xlu0 %v1772
        %v1774 = vpop.xlane.xlu0 %1773
        %v1775 = vadd.f32 %v1651, %v1653
        %1776 = vadd.xlane.f32.xlu0 %v1775
        %v1777 = vpop.xlane.xlu0 %1776
        %v1778 = vadd.f32 %v1655, %v1657
        %1779 = vadd.xlane.f32.xlu0 %v1778
        %v1780 = vpop.xlane.xlu0 %1779
        %v1781 = vadd.f32 %v1659, %v1661
        %1782 = vadd.xlane.f32.xlu0 %v1781
        %v1783 = vpop.xlane.xlu0 %1782
        %v1784 = vadd.f32 %v1663, %v1665
        %1785 = vadd.xlane.f32.xlu0 %v1784
        %v1786 = vpop.xlane.xlu0 %1785
        %v1787 = vadd.f32 %v1667, %v1669
        %1788 = vadd.xlane.f32.xlu0 %v1787
        %v1789 = vpop.xlane.xlu0 %1788
        %v1790 = vadd.f32 %v1671, %v1673
        %1791 = vadd.xlane.f32.xlu0 %v1790
        %v1792 = vpop.xlane.xlu0 %1791
        %v1793 = vadd.f32 %v1675, %v1677
        %1794 = vadd.xlane.f32.xlu0 %v1793
        %v1795 = vpop.xlane.xlu0 %1794
        %v1796 = vadd.f32 %v1679, %v1681
        %1797 = vadd.xlane.f32.xlu0 %v1796
        %v1798 = vpop.xlane.xlu0 %1797
        %v1799 = vadd.f32 %v1683, %v1685
        %1800 = vadd.xlane.f32.xlu0 %v1799
        %v1801 = vpop.xlane.xlu0 %1800
        %v1802 = vadd.f32 %v1687, %v1689
        %1803 = vadd.xlane.f32.xlu0 %v1802
        %v1804 = vpop.xlane.xlu0 %1803
        %v1805 = vadd.f32 %v1691, %v1693
        %1806 = vadd.xlane.f32.xlu0 %v1805
        %v1807 = vpop.xlane.xlu0 %1806
        %v1808 = vadd.f32 %v1695, %v1697
        %1809 = vadd.xlane.f32.xlu0 %v1808
        %v1810 = vpop.xlane.xlu0 %1809
        %v1811 = vadd.f32 %v1699, %v1701
        %1812 = vadd.xlane.f32.xlu0 %v1811
        %v1813 = vpop.xlane.xlu0 %1812
        %v1814 = vadd.f32 %v1703, %v1705
        %1815 = vadd.xlane.f32.xlu0 %v1814
        %v1816 = vpop.xlane.xlu0 %1815
        %v1817 = vadd.f32 %v1707, %v1709
        %1818 = vadd.xlane.f32.xlu0 %v1817
        %v1819 = vpop.xlane.xlu0 %1818
        %v1820 = vadd.f32 %v1711, %v1713
        %1821 = vadd.xlane.f32.xlu0 %v1820
        %v1822 = vpop.xlane.xlu0 %1821
        %v1823 = vadd.f32 %v1715, %v1717
        %1824 = vadd.xlane.f32.xlu0 %v1823
        %v1825 = vpop.xlane.xlu0 %1824
        %v1826 = vadd.f32 %v1719, %v1721
        %1827 = vadd.xlane.f32.xlu0 %v1826
        %v1828 = vpop.xlane.xlu0 %1827
        %v1829 = vadd.f32 %v1723, %v1725
        %1830 = vadd.xlane.f32.xlu0 %v1829
        %v1831 = vpop.xlane.xlu0 %1830
        %v1832 = vadd.f32 %v1727, %v1729
        %1833 = vadd.xlane.f32.xlu0 %v1832
        %v1834 = vpop.xlane.xlu0 %1833
        %v1835 = vadd.f32 %v1731, %v1733
        %1836 = vadd.xlane.f32.xlu0 %v1835
        %v1837 = vpop.xlane.xlu0 %1836
        %v1838 = vadd.f32 %v1735, %v1737
        %1839 = vadd.xlane.f32.xlu0 %v1838
        %v1840 = vpop.xlane.xlu0 %1839
        %v1841 = vadd.f32 %v1739, %v1741
        %1842 = vadd.xlane.f32.xlu0 %v1841
        %v1843 = vpop.xlane.xlu0 %1842
        %v1844 = vadd.f32 %v1743, %v1745
        %1845 = vadd.xlane.f32.xlu0 %v1844
        %v1846 = vpop.xlane.xlu0 %1845
        %v1847 = vadd.f32 %v1747, %v1749
        %1848 = vadd.xlane.f32.xlu0 %v1847
        %v1849 = vpop.xlane.xlu0 %1848
        %v1850 = vadd.f32 %v1751, %v1753
        %1851 = vadd.xlane.f32.xlu0 %v1850
        %v1852 = vpop.xlane.xlu0 %1851
        %v1853 = vadd.f32 %v1755, %v1757
        %1854 = vadd.xlane.f32.xlu0 %v1853
        %v1855 = vpop.xlane.xlu0 %1854
        %v1856 = vadd.f32 %v1759, %v1761
        %1857 = vadd.xlane.f32.xlu0 %v1856
        %v1858 = vpop.xlane.xlu0 %1857
        %v1859 = vadd.f32 %v1763, %v1765
        %1860 = vadd.xlane.f32.xlu0 %v1859
        %v1861 = vpop.xlane.xlu0 %1860
        %v1862 = vpack.c.bf16 %v1643, %v1639
        %v1863 = vpack.c.bf16 %v1645, %v1641
        %v1864 = vpack.c.bf16 %v1651, %v1647
        %v1865 = vpack.c.bf16 %v1653, %v1649
        %v1866 = vpack.c.bf16 %v1659, %v1655
        %v1867 = vpack.c.bf16 %v1661, %v1657
        %v1868 = vpack.c.bf16 %v1667, %v1663
        %v1869 = vpack.c.bf16 %v1669, %v1665
        %v1870 = vpack.c.bf16 %v1675, %v1671
        %v1871 = vpack.c.bf16 %v1677, %v1673
        %v1872 = vpack.c.bf16 %v1683, %v1679
        %v1873 = vpack.c.bf16 %v1685, %v1681
        %v1874 = vpack.c.bf16 %v1691, %v1687
        %v1875 = vpack.c.bf16 %v1693, %v1689
        %v1876 = vpack.c.bf16 %v1699, %v1695
        %v1877 = vpack.c.bf16 %v1701, %v1697
        %v1878 = vpack.c.bf16 %v1707, %v1703
        %v1879 = vpack.c.bf16 %v1709, %v1705
        %v1880 = vpack.c.bf16 %v1715, %v1711
        %v1881 = vpack.c.bf16 %v1717, %v1713
        %v1882 = vpack.c.bf16 %v1723, %v1719
        %v1883 = vpack.c.bf16 %v1725, %v1721
        %v1884 = vpack.c.bf16 %v1731, %v1727
        %v1885 = vpack.c.bf16 %v1733, %v1729
        %v1886 = vpack.c.bf16 %v1739, %v1735
        %v1887 = vpack.c.bf16 %v1741, %v1737
        %v1888 = vpack.c.bf16 %v1747, %v1743
        %v1889 = vpack.c.bf16 %v1749, %v1745
        %v1890 = vpack.c.bf16 %v1755, %v1751
        %v1891 = vpack.c.bf16 %v1757, %v1753
        %v1892 = vpack.c.bf16 %v1763, %v1759
        %v1893 = vpack.c.bf16 %v1765, %v1761
        %1894 = vmatprep.subr.bf16.mxu0 0
        %1895 = vmatpush1.bf16.msra.mxu0 %v1276
        %1896 = vmatprep.subr.bf16.mxu0 0
        %1897 = vmatpush1.bf16.msra.mxu0 %v1275
        %1898 = vmatprep.subr.bf16.mxu0 0
        %1899 = vmatpush1.bf16.msra.mxu0 %v1274
        %1900 = vmatprep.subr.bf16.mxu0 0
        %1901 = vmatpush1.bf16.msra.mxu0 %v1273
        %1902 = vmatprep.subr.bf16.mxu0 0
        %1903 = vmatpush1.bf16.msra.mxu0 %v1272
        %1904 = vmatprep.subr.bf16.mxu0 0
        %1905 = vmatpush1.bf16.msra.mxu0 %v1271
        %1906 = vmatprep.subr.bf16.mxu0 0
        %1907 = vmatpush1.bf16.msra.mxu0 %v1270
        %1908 = vmatprep.subr.bf16.mxu0 0
        %1909 = vmatpush1.bf16.msra.mxu0 %v1269
        %1910 = vmatprep.subr.bf16.mxu0 0
        %1911 = vmatpush2.bf16.msra.mxu0 %v1284
        %1912 = vmatprep.subr.bf16.mxu0 0
        %1913 = vmatpush2.bf16.msra.mxu0 %v1283
        %1914 = vmatprep.subr.bf16.mxu0 0
        %1915 = vmatpush2.bf16.msra.mxu0 %v1282
        %1916 = vmatprep.subr.bf16.mxu0 0
        %1917 = vmatpush2.bf16.msra.mxu0 %v1281
        %1918 = vmatprep.subr.bf16.mxu0 0
        %1919 = vmatpush2.bf16.msra.mxu0 %v1280
        %1920 = vmatprep.subr.bf16.mxu0 0
        %1921 = vmatpush2.bf16.msra.mxu0 %v1279
        %1922 = vmatprep.subr.bf16.mxu0 0
        %1923 = vmatpush2.bf16.msra.mxu0 %v1278
        %1924 = vmatprep.subr.bf16.mxu0 0
        %1925 = vmatpush2.bf16.msra.mxu0 %v1277
        %1926 = vmatprep.mubr.bf16.mxu0 %v1863
        %1927 = vmatmul.mubr.bf16.gmra.mxu0 %v1862
        %v1928 = vpop.f32.mrf.mxu0
        %v1929 = vadd.f32 0.0, %v1928
        %v1930 = vpop.f32.mrf.mxu0
        %v1931 = vpop.f32.mrf.mxu0
        %v1932 = vadd.f32 0.0, %v1931
        %v1933 = vpop.f32.mrf.mxu0
        %1934 = vmatprep.mubr.bf16.mxu0 %v1865
        %1935 = vmatmul.mubr.bf16.gmra.mxu0 %v1864
        %v1936 = vpop.f32.mrf.mxu0
        %v1937 = vadd.f32 0.0, %v1936
        %v1938 = vpop.f32.mrf.mxu0
        %v1939 = vpop.f32.mrf.mxu0
        %v1940 = vadd.f32 0.0, %v1939
        %v1941 = vpop.f32.mrf.mxu0
        %1942 = vmatprep.mubr.bf16.mxu0 %v1867
        %1943 = vmatmul.mubr.bf16.gmra.mxu0 %v1866
        %v1944 = vpop.f32.mrf.mxu0
        %v1945 = vadd.f32 0.0, %v1944
        %v1946 = vpop.f32.mrf.mxu0
        %v1947 = vpop.f32.mrf.mxu0
        %v1948 = vadd.f32 0.0, %v1947
        %v1949 = vpop.f32.mrf.mxu0
        %1950 = vmatprep.mubr.bf16.mxu0 %v1869
        %1951 = vmatmul.mubr.bf16.gmra.mxu0 %v1868
        %v1952 = vpop.f32.mrf.mxu0
        %v1953 = vadd.f32 0.0, %v1952
        %v1954 = vpop.f32.mrf.mxu0
        %v1955 = vpop.f32.mrf.mxu0
        %v1956 = vadd.f32 0.0, %v1955
        %v1957 = vpop.f32.mrf.mxu0
        %1958 = vmatprep.mubr.bf16.mxu0 %v1871
        %1959 = vmatmul.mubr.bf16.gmra.mxu0 %v1870
        %v1960 = vpop.f32.mrf.mxu0
        %v1961 = vadd.f32 0.0, %v1960
        %v1962 = vpop.f32.mrf.mxu0
        %v1963 = vpop.f32.mrf.mxu0
        %v1964 = vadd.f32 0.0, %v1963
        %v1965 = vpop.f32.mrf.mxu0
        %1966 = vmatprep.mubr.bf16.mxu0 %v1873
        %1967 = vmatmul.mubr.bf16.gmra.mxu0 %v1872
        %v1968 = vpop.f32.mrf.mxu0
        %v1969 = vadd.f32 0.0, %v1968
        %v1970 = vpop.f32.mrf.mxu0
        %v1971 = vpop.f32.mrf.mxu0
        %v1972 = vadd.f32 0.0, %v1971
        %v1973 = vpop.f32.mrf.mxu0
        %1974 = vmatprep.mubr.bf16.mxu0 %v1875
        %1975 = vmatmul.mubr.bf16.gmra.mxu0 %v1874
        %v1976 = vpop.f32.mrf.mxu0
        %v1977 = vadd.f32 0.0, %v1976
        %v1978 = vpop.f32.mrf.mxu0
        %v1979 = vpop.f32.mrf.mxu0
        %v1980 = vadd.f32 0.0, %v1979
        %v1981 = vpop.f32.mrf.mxu0
        %1982 = vmatprep.mubr.bf16.mxu0 %v1877
        %1983 = vmatmul.mubr.bf16.gmra.mxu0 %v1876
        %v1984 = vpop.f32.mrf.mxu0
        %v1985 = vadd.f32 0.0, %v1984
        %v1986 = vpop.f32.mrf.mxu0
        %v1987 = vpop.f32.mrf.mxu0
        %v1988 = vadd.f32 0.0, %v1987
        %v1989 = vpop.f32.mrf.mxu0
        %1990 = vmatprep.mubr.bf16.mxu0 %v1879
        %1991 = vmatmul.mubr.bf16.gmra.mxu0 %v1878
        %v1992 = vpop.f32.mrf.mxu0
        %v1993 = vadd.f32 0.0, %v1992
        %v1994 = vpop.f32.mrf.mxu0
        %v1995 = vpop.f32.mrf.mxu0
        %v1996 = vadd.f32 0.0, %v1995
        %v1997 = vpop.f32.mrf.mxu0
        %1998 = vmatprep.mubr.bf16.mxu0 %v1881
        %1999 = vmatmul.mubr.bf16.gmra.mxu0 %v1880
        %v2000 = vpop.f32.mrf.mxu0
        %v2001 = vadd.f32 0.0, %v2000
        %v2002 = vpop.f32.mrf.mxu0
        %v2003 = vpop.f32.mrf.mxu0
        %v2004 = vadd.f32 0.0, %v2003
        %v2005 = vpop.f32.mrf.mxu0
        %2006 = vmatprep.mubr.bf16.mxu0 %v1883
        %2007 = vmatmul.mubr.bf16.gmra.mxu0 %v1882
        %v2008 = vpop.f32.mrf.mxu0
        %v2009 = vadd.f32 0.0, %v2008
        %v2010 = vpop.f32.mrf.mxu0
        %v2011 = vpop.f32.mrf.mxu0
        %v2012 = vadd.f32 0.0, %v2011
        %v2013 = vpop.f32.mrf.mxu0
        %2014 = vmatprep.mubr.bf16.mxu0 %v1885
        %2015 = vmatmul.mubr.bf16.gmra.mxu0 %v1884
        %v2016 = vpop.f32.mrf.mxu0
        %v2017 = vadd.f32 0.0, %v2016
        %v2018 = vpop.f32.mrf.mxu0
        %v2019 = vpop.f32.mrf.mxu0
        %v2020 = vadd.f32 0.0, %v2019
        %v2021 = vpop.f32.mrf.mxu0
        %2022 = vmatprep.mubr.bf16.mxu0 %v1887
        %2023 = vmatmul.mubr.bf16.gmra.mxu0 %v1886
        %v2024 = vpop.f32.mrf.mxu0
        %v2025 = vadd.f32 0.0, %v2024
        %v2026 = vpop.f32.mrf.mxu0
        %v2027 = vpop.f32.mrf.mxu0
        %v2028 = vadd.f32 0.0, %v2027
        %v2029 = vpop.f32.mrf.mxu0
        %2030 = vmatprep.mubr.bf16.mxu0 %v1889
        %2031 = vmatmul.mubr.bf16.gmra.mxu0 %v1888
        %v2032 = vpop.f32.mrf.mxu0
        %v2033 = vadd.f32 0.0, %v2032
        %v2034 = vpop.f32.mrf.mxu0
        %v2035 = vpop.f32.mrf.mxu0
        %v2036 = vadd.f32 0.0, %v2035
        %v2037 = vpop.f32.mrf.mxu0
        %2038 = vmatprep.mubr.bf16.mxu0 %v1891
        %2039 = vmatmul.mubr.bf16.gmra.mxu0 %v1890
        %v2040 = vpop.f32.mrf.mxu0
        %v2041 = vadd.f32 0.0, %v2040
        %v2042 = vpop.f32.mrf.mxu0
        %v2043 = vpop.f32.mrf.mxu0
        %v2044 = vadd.f32 0.0, %v2043
        %v2045 = vpop.f32.mrf.mxu0
        %2046 = vmatprep.mubr.bf16.mxu0 %v1893
        %2047 = vmatmul.mubr.bf16.gmra.mxu0 %v1892
        %v2048 = vpop.f32.mrf.mxu0
        %v2049 = vadd.f32 0.0, %v2048
        %v2050 = vpop.f32.mrf.mxu0
        %v2051 = vpop.f32.mrf.mxu0
        %v2052 = vadd.f32 0.0, %v2051
        %v2053 = vpop.f32.mrf.mxu0
        %2054 = vdwg.mxu0
        %v2055 = vrcp.pop %v1768
        %v2056 = vrcp.pop %v1771
        %v2057 = vrcp.pop %v1774
        %v2058 = vrcp.pop %v1777
        %v2059 = vrcp.pop %v1780
        %v2060 = vrcp.pop %v1783
        %v2061 = vrcp.pop %v1786
        %v2062 = vrcp.pop %v1789
        %v2063 = vrcp.pop %v1792
        %v2064 = vrcp.pop %v1795
        %v2065 = vrcp.pop %v1798
        %v2066 = vrcp.pop %v1801
        %v2067 = vrcp.pop %v1804
        %v2068 = vrcp.pop %v1807
        %v2069 = vrcp.pop %v1810
        %v2070 = vrcp.pop %v1813
        %v2071 = vrcp.pop %v1816
        %v2072 = vrcp.pop %v1819
        %v2073 = vrcp.pop %v1822
        %v2074 = vrcp.pop %v1825
        %v2075 = vrcp.pop %v1828
        %v2076 = vrcp.pop %v1831
        %v2077 = vrcp.pop %v1834
        %v2078 = vrcp.pop %v1837
        %v2079 = vrcp.pop %v1840
        %v2080 = vrcp.pop %v1843
        %v2081 = vrcp.pop %v1846
        %v2082 = vrcp.pop %v1849
        %v2083 = vrcp.pop %v1852
        %v2084 = vrcp.pop %v1855
        %v2085 = vrcp.pop %v1858
        %v2086 = vrcp.pop %v1861
        %v2087 = vmul.f32 %v1929, %v2055
        %v2088 = vmul.f32 %v1932, %v2056
        %v2089 = vmul.f32 %v1937, %v2057
        %v2090 = vmul.f32 %v1940, %v2058
        %v2091 = vmul.f32 %v1945, %v2059
        %v2092 = vmul.f32 %v1948, %v2060
        %v2093 = vmul.f32 %v1953, %v2061
        %v2094 = vmul.f32 %v1956, %v2062
        %v2095 = vmul.f32 %v1961, %v2063
        %v2096 = vmul.f32 %v1964, %v2064
        %v2097 = vmul.f32 %v1969, %v2065
        %v2098 = vmul.f32 %v1972, %v2066
        %v2099 = vmul.f32 %v1977, %v2067
        %v2100 = vmul.f32 %v1980, %v2068
        %v2101 = vmul.f32 %v1985, %v2069
        %v2102 = vmul.f32 %v1988, %v2070
        %v2103 = vmul.f32 %v1993, %v2071
        %v2104 = vmul.f32 %v1996, %v2072
        %v2105 = vmul.f32 %v2001, %v2073
        %v2106 = vmul.f32 %v2004, %v2074
        %v2107 = vmul.f32 %v2009, %v2075
        %v2108 = vmul.f32 %v2012, %v2076
        %v2109 = vmul.f32 %v2017, %v2077
        %v2110 = vmul.f32 %v2020, %v2078
        %v2111 = vmul.f32 %v2025, %v2079
        %v2112 = vmul.f32 %v2028, %v2080
        %v2113 = vmul.f32 %v2033, %v2081
        %v2114 = vmul.f32 %v2036, %v2082
        %v2115 = vmul.f32 %v2041, %v2083
        %v2116 = vmul.f32 %v2044, %v2084
        %v2117 = vmul.f32 %v2049, %v2085
        %v2118 = vmul.f32 %v2052, %v2086
        %v2119 = vpack.c.bf16 %v2088, %v2087
        %v2120 = vpack.c.bf16 %v2090, %v2089
        %v2121 = vpack.c.bf16 %v2092, %v2091
        %v2122 = vpack.c.bf16 %v2094, %v2093
        %v2123 = vpack.c.bf16 %v2096, %v2095
        %v2124 = vpack.c.bf16 %v2098, %v2097
        %v2125 = vpack.c.bf16 %v2100, %v2099
        %v2126 = vpack.c.bf16 %v2102, %v2101
        %v2127 = vpack.c.bf16 %v2104, %v2103
        %v2128 = vpack.c.bf16 %v2106, %v2105
        %v2129 = vpack.c.bf16 %v2108, %v2107
        %v2130 = vpack.c.bf16 %v2110, %v2109
        %v2131 = vpack.c.bf16 %v2112, %v2111
        %v2132 = vpack.c.bf16 %v2114, %v2113
        %v2133 = vpack.c.bf16 %v2116, %v2115
        %v2134 = vpack.c.bf16 %v2118, %v2117
        %v2135 = vld [vmem:[#allocation8] sm:$0xf]
        %v2136 = vld [vmem:[#allocation8 + $0x4] sm:$0xf]
        %v2137 = vld [vmem:[#allocation8 + $0x8] sm:$0xf]
        %v2138 = vld [vmem:[#allocation8 + $0xc] sm:$0xf]
        %v2139 = vld [vmem:[#allocation8 + $0x10] sm:$0xf]
        %v2140 = vld [vmem:[#allocation8 + $0x14] sm:$0xf]
        %v2141 = vld [vmem:[#allocation8 + $0x18] sm:$0xf]
        %v2142 = vld [vmem:[#allocation8 + $0x1c] sm:$0xf]
        %v2143 = vld [vmem:[#allocation8 + $0x20] sm:$0xf]
        %v2144 = vld [vmem:[#allocation8 + $0x24] sm:$0xf]
        %v2145 = vld [vmem:[#allocation8 + $0x28] sm:$0xf]
        %v2146 = vld [vmem:[#allocation8 + $0x2c] sm:$0xf]
        %v2147 = vld [vmem:[#allocation8 + $0x30] sm:$0xf]
        %v2148 = vld [vmem:[#allocation8 + $0x34] sm:$0xf]
        %v2149 = vld [vmem:[#allocation8 + $0x38] sm:$0xf]
        %v2150 = vld [vmem:[#allocation8 + $0x3c] sm:$0xf]
        %v2151 = vld [vmem:[%s5] sm:$0x1]
        %v2153 = vlaneseq
        %v2154 = vshrl.u32 %v2153, 7
        %v2155 = vsub.s32 0, %v2154
        %v2156 = vrot.slane %v2151, %v2155
        %v2174 = vunpack.c.l.b16 %v2135
        %v2175 = vunpack.c.l.b16 %v2136
        %v2176 = vunpack.c.l.b16 %v2137
        %v2177 = vunpack.c.l.b16 %v2138
        %v2178 = vunpack.c.l.b16 %v2139
        %v2179 = vunpack.c.l.b16 %v2140
        %v2180 = vunpack.c.l.b16 %v2141
        %v2181 = vunpack.c.l.b16 %v2142
        %v2182 = vunpack.c.l.b16 %v2143
        %v2183 = vunpack.c.l.b16 %v2144
        %v2184 = vunpack.c.l.b16 %v2145
        %v2185 = vunpack.c.l.b16 %v2146
        %v2186 = vunpack.c.l.b16 %v2147
        %v2187 = vunpack.c.l.b16 %v2148
        %v2188 = vunpack.c.l.b16 %v2149
        %v2189 = vunpack.c.l.b16 %v2150
        %v2190 = vpack.c.b16 %v2175, %v2174
        %v2191 = vpack.c.b16 %v2177, %v2176
        %v2192 = vpack.c.b16 %v2179, %v2178
        %v2193 = vpack.c.b16 %v2181, %v2180
        %v2194 = vpack.c.b16 %v2183, %v2182
        %v2195 = vpack.c.b16 %v2185, %v2184
        %v2196 = vpack.c.b16 %v2187, %v2186
        %v2197 = vpack.c.b16 %v2189, %v2188
        %2206 = vmatprep.subr.bf16.mxu0 0
        %2207 = vmatpush1.bf16.msra.mxu0 %v2197
        %2208 = vmatprep.subr.bf16.mxu0 0
        %2209 = vmatpush1.bf16.msra.mxu0 %v2196
        %2210 = vmatprep.subr.bf16.mxu0 0
        %2211 = vmatpush1.bf16.msra.mxu0 %v2195
        %2212 = vmatprep.subr.bf16.mxu0 0
        %2213 = vmatpush1.bf16.msra.mxu0 %v2194
        %2214 = vmatprep.subr.bf16.mxu0 0
        %2215 = vmatpush1.bf16.msra.mxu0 %v2193
        %2216 = vmatprep.subr.bf16.mxu0 0
        %2217 = vmatpush1.bf16.msra.mxu0 %v2192
        %2218 = vmatprep.subr.bf16.mxu0 0
        %2219 = vmatpush1.bf16.msra.mxu0 %v2191
        %2220 = vmatprep.subr.bf16.mxu0 0
        %2221 = vmatpush1.bf16.msra.mxu0 %v2190
        %2222 = vmatprep.subr.bf16.mxu0 0
        %2223 = vmatpush2.bf16.msra.mxu0 0
        %2224 = vmatprep.subr.bf16.mxu0 0
        %2225 = vmatpush2.bf16.msra.mxu0 0
        %2226 = vmatprep.subr.bf16.mxu0 0
        %2227 = vmatpush2.bf16.msra.mxu0 0
        %2228 = vmatprep.subr.bf16.mxu0 0
        %2229 = vmatpush2.bf16.msra.mxu0 0
        %2230 = vmatprep.subr.bf16.mxu0 0
        %2231 = vmatpush2.bf16.msra.mxu0 0
        %2232 = vmatprep.subr.bf16.mxu0 0
        %2233 = vmatpush2.bf16.msra.mxu0 0
        %2234 = vmatprep.subr.bf16.mxu0 0
        %2235 = vmatpush2.bf16.msra.mxu0 0
        %2236 = vmatprep.subr.bf16.mxu0 0
        %2237 = vmatpush2.bf16.msra.mxu0 0
        %2238 = vmatprep.mubr.bf16.mxu0 0
        %2239 = vmatmul.mubr.bf16.gmra.mxu0 %v2119
        %v2240 = vpop.f32.mrf.mxu0
        %v2241 = vadd.f32 %v2156, %v2240
        %v2242 = vpop.f32.mrf.mxu0
        %v2243 = vpop.f32.mrf.mxu0
        %v2244 = vadd.f32 %v2156, %v2243
        %v2245 = vpop.f32.mrf.mxu0
        %2246 = vmatprep.mubr.bf16.mxu0 0
        %2247 = vmatmul.mubr.bf16.gmra.mxu0 %v2120
        %v2248 = vpop.f32.mrf.mxu0
        %v2249 = vadd.f32 %v2156, %v2248
        %v2250 = vpop.f32.mrf.mxu0
        %v2251 = vpop.f32.mrf.mxu0
        %v2252 = vadd.f32 %v2156, %v2251
        %v2253 = vpop.f32.mrf.mxu0
        %2254 = vmatprep.mubr.bf16.mxu0 0
        %2255 = vmatmul.mubr.bf16.gmra.mxu0 %v2121
        %v2256 = vpop.f32.mrf.mxu0
        %v2257 = vadd.f32 %v2156, %v2256
        %v2258 = vpop.f32.mrf.mxu0
        %v2259 = vpop.f32.mrf.mxu0
        %v2260 = vadd.f32 %v2156, %v2259
        %v2261 = vpop.f32.mrf.mxu0
        %2262 = vmatprep.mubr.bf16.mxu0 0
        %2263 = vmatmul.mubr.bf16.gmra.mxu0 %v2122
        %v2264 = vpop.f32.mrf.mxu0
        %v2265 = vadd.f32 %v2156, %v2264
        %v2266 = vpop.f32.mrf.mxu0
        %v2267 = vpop.f32.mrf.mxu0
        %v2268 = vadd.f32 %v2156, %v2267
        %v2269 = vpop.f32.mrf.mxu0
        %2270 = vmatprep.mubr.bf16.mxu0 0
        %2271 = vmatmul.mubr.bf16.gmra.mxu0 %v2123
        %v2272 = vpop.f32.mrf.mxu0
        %v2273 = vadd.f32 %v2156, %v2272
        %v2274 = vpop.f32.mrf.mxu0
        %v2275 = vpop.f32.mrf.mxu0
        %v2276 = vadd.f32 %v2156, %v2275
        %v2277 = vpop.f32.mrf.mxu0
        %2278 = vmatprep.mubr.bf16.mxu0 0
        %2279 = vmatmul.mubr.bf16.gmra.mxu0 %v2124
        %v2280 = vpop.f32.mrf.mxu0
        %v2281 = vadd.f32 %v2156, %v2280
        %v2282 = vpop.f32.mrf.mxu0
        %v2283 = vpop.f32.mrf.mxu0
        %v2284 = vadd.f32 %v2156, %v2283
        %v2285 = vpop.f32.mrf.mxu0
        %2286 = vmatprep.mubr.bf16.mxu0 0
        %2287 = vmatmul.mubr.bf16.gmra.mxu0 %v2125
        %v2288 = vpop.f32.mrf.mxu0
        %v2289 = vadd.f32 %v2156, %v2288
        %v2290 = vpop.f32.mrf.mxu0
        %v2291 = vpop.f32.mrf.mxu0
        %v2292 = vadd.f32 %v2156, %v2291
        %v2293 = vpop.f32.mrf.mxu0
        %2294 = vmatprep.mubr.bf16.mxu0 0
        %2295 = vmatmul.mubr.bf16.gmra.mxu0 %v2126
        %v2296 = vpop.f32.mrf.mxu0
        %v2297 = vadd.f32 %v2156, %v2296
        %v2298 = vpop.f32.mrf.mxu0
        %v2299 = vpop.f32.mrf.mxu0
        %v2300 = vadd.f32 %v2156, %v2299
        %v2301 = vpop.f32.mrf.mxu0
        %2302 = vmatprep.mubr.bf16.mxu0 0
        %2303 = vmatmul.mubr.bf16.gmra.mxu0 %v2127
        %v2304 = vpop.f32.mrf.mxu0
        %v2305 = vadd.f32 %v2156, %v2304
        %v2306 = vpop.f32.mrf.mxu0
        %v2307 = vpop.f32.mrf.mxu0
        %v2308 = vadd.f32 %v2156, %v2307
        %v2309 = vpop.f32.mrf.mxu0
        %2310 = vmatprep.mubr.bf16.mxu0 0
        %2311 = vmatmul.mubr.bf16.gmra.mxu0 %v2128
        %v2312 = vpop.f32.mrf.mxu0
        %v2313 = vadd.f32 %v2156, %v2312
        %v2314 = vpop.f32.mrf.mxu0
        %v2315 = vpop.f32.mrf.mxu0
        %v2316 = vadd.f32 %v2156, %v2315
        %v2317 = vpop.f32.mrf.mxu0
        %2318 = vmatprep.mubr.bf16.mxu0 0
        %2319 = vmatmul.mubr.bf16.gmra.mxu0 %v2129
        %v2320 = vpop.f32.mrf.mxu0
        %v2321 = vadd.f32 %v2156, %v2320
        %v2322 = vpop.f32.mrf.mxu0
        %v2323 = vpop.f32.mrf.mxu0
        %v2324 = vadd.f32 %v2156, %v2323
        %v2325 = vpop.f32.mrf.mxu0
        %2326 = vmatprep.mubr.bf16.mxu0 0
        %2327 = vmatmul.mubr.bf16.gmra.mxu0 %v2130
        %v2328 = vpop.f32.mrf.mxu0
        %v2329 = vadd.f32 %v2156, %v2328
        %v2330 = vpop.f32.mrf.mxu0
        %v2331 = vpop.f32.mrf.mxu0
        %v2332 = vadd.f32 %v2156, %v2331
        %v2333 = vpop.f32.mrf.mxu0
        %2334 = vmatprep.mubr.bf16.mxu0 0
        %2335 = vmatmul.mubr.bf16.gmra.mxu0 %v2131
        %v2336 = vpop.f32.mrf.mxu0
        %v2337 = vadd.f32 %v2156, %v2336
        %v2338 = vpop.f32.mrf.mxu0
        %v2339 = vpop.f32.mrf.mxu0
        %v2340 = vadd.f32 %v2156, %v2339
        %v2341 = vpop.f32.mrf.mxu0
        %2342 = vmatprep.mubr.bf16.mxu0 0
        %2343 = vmatmul.mubr.bf16.gmra.mxu0 %v2132
        %v2344 = vpop.f32.mrf.mxu0
        %v2345 = vadd.f32 %v2156, %v2344
        %v2346 = vpop.f32.mrf.mxu0
        %v2347 = vpop.f32.mrf.mxu0
        %v2348 = vadd.f32 %v2156, %v2347
        %v2349 = vpop.f32.mrf.mxu0
        %2350 = vmatprep.mubr.bf16.mxu0 0
        %2351 = vmatmul.mubr.bf16.gmra.mxu0 %v2133
        %v2352 = vpop.f32.mrf.mxu0
        %v2353 = vadd.f32 %v2156, %v2352
        %v2354 = vpop.f32.mrf.mxu0
        %v2355 = vpop.f32.mrf.mxu0
        %v2356 = vadd.f32 %v2156, %v2355
        %v2357 = vpop.f32.mrf.mxu0
        %2358 = vmatprep.mubr.bf16.mxu0 0
        %2359 = vmatmul.mubr.bf16.gmra.mxu0 %v2134
        %v2360 = vpop.f32.mrf.mxu0
        %v2361 = vadd.f32 %v2156, %v2360
        %v2362 = vpop.f32.mrf.mxu0
        %v2363 = vpop.f32.mrf.mxu0
        %v2364 = vadd.f32 %v2156, %v2363
        %v2365 = vpop.f32.mrf.mxu0
        %2366 = vdwg.mxu0
        %v2367 = vadd.f32 %v363, %v2241
        %v2368 = vadd.f32 %v364, %v2244
        %v2369 = vadd.f32 %v365, %v2249
        %v2370 = vadd.f32 %v366, %v2252
        %v2371 = vadd.f32 %v367, %v2257
        %v2372 = vadd.f32 %v368, %v2260
        %v2373 = vadd.f32 %v369, %v2265
        %v2374 = vadd.f32 %v370, %v2268
        %v2375 = vadd.f32 %v371, %v2273
        %v2376 = vadd.f32 %v372, %v2276
        %v2377 = vadd.f32 %v373, %v2281
        %v2378 = vadd.f32 %v374, %v2284
        %v2379 = vadd.f32 %v375, %v2289
        %v2380 = vadd.f32 %v376, %v2292
        %v2381 = vadd.f32 %v377, %v2297
        %v2382 = vadd.f32 %v378, %v2300
        %v2383 = vadd.f32 %v395, %v2305
        %v2384 = vadd.f32 %v396, %v2308
        %v2385 = vadd.f32 %v397, %v2313
        %v2386 = vadd.f32 %v398, %v2316
        %v2387 = vadd.f32 %v399, %v2321
        %v2388 = vadd.f32 %v400, %v2324
        %v2389 = vadd.f32 %v401, %v2329
        %v2390 = vadd.f32 %v402, %v2332
        %v2391 = vadd.f32 %v403, %v2337
        %v2392 = vadd.f32 %v404, %v2340
        %v2393 = vadd.f32 %v405, %v2345
        %v2394 = vadd.f32 %v406, %v2348
        %v2395 = vadd.f32 %v407, %v2353
        %v2396 = vadd.f32 %v408, %v2356
        %v2397 = vadd.f32 %v409, %v2361
        %v2398 = vadd.f32 %v410, %v2364
        %2399 = vxpose.xlu0.b32.start [1/16] %v2367, 128
        %2400 = vxpose.xlu0.b32.cont [2/16] %v2368, 128
        %2401 = vxpose.xlu0.b32.cont [3/16] %v2369, 128
        %2402 = vxpose.xlu0.b32.cont [4/16] %v2370, 128
        %2403 = vxpose.xlu0.b32.cont [5/16] %v2371, 128
        %2404 = vxpose.xlu0.b32.cont [6/16] %v2372, 128
        %2405 = vxpose.xlu0.b32.cont [7/16] %v2373, 128
        %2406 = vxpose.xlu0.b32.cont [8/16] %v2374, 128
        %2407 = vxpose.xlu0.b32.cont [9/16] %v2375, 128
        %2408 = vxpose.xlu0.b32.cont [10/16] %v2376, 128
        %2409 = vxpose.xlu0.b32.cont [11/16] %v2377, 128
        %2410 = vxpose.xlu0.b32.cont [12/16] %v2378, 128
        %2411 = vxpose.xlu0.b32.cont [13/16] %v2379, 128
        %2412 = vxpose.xlu0.b32.cont [14/16] %v2380, 128
        %2413 = vxpose.xlu0.b32.cont [15/16] %v2381, 128
        %2414 = vxpose.xlu0.b32.end [16/16] %v2382, 128
        %v2415 = vpop.trf.xlu0
        %v2416 = vpop.trf.xlu0
        %v2417 = vpop.trf.xlu0
        %v2418 = vpop.trf.xlu0
        %v2419 = vpop.trf.xlu0
        %v2420 = vpop.trf.xlu0
        %v2421 = vpop.trf.xlu0
        %v2422 = vpop.trf.xlu0
        %v2423 = vpop.trf.xlu0
        %v2424 = vpop.trf.xlu0
        %v2425 = vpop.trf.xlu0
        %v2426 = vpop.trf.xlu0
        %v2427 = vpop.trf.xlu0
        %v2428 = vpop.trf.xlu0
        %v2429 = vpop.trf.xlu0
        %v2430 = vpop.trf.xlu0
        %2431 = vxpose.xlu0.b32.start [1/16] %v2383, 128
        %2432 = vxpose.xlu0.b32.cont [2/16] %v2384, 128
        %2433 = vxpose.xlu0.b32.cont [3/16] %v2385, 128
        %2434 = vxpose.xlu0.b32.cont [4/16] %v2386, 128
        %2435 = vxpose.xlu0.b32.cont [5/16] %v2387, 128
        %2436 = vxpose.xlu0.b32.cont [6/16] %v2388, 128
        %2437 = vxpose.xlu0.b32.cont [7/16] %v2389, 128
        %2438 = vxpose.xlu0.b32.cont [8/16] %v2390, 128
        %2439 = vxpose.xlu0.b32.cont [9/16] %v2391, 128
        %2440 = vxpose.xlu0.b32.cont [10/16] %v2392, 128
        %2441 = vxpose.xlu0.b32.cont [11/16] %v2393, 128
        %2442 = vxpose.xlu0.b32.cont [12/16] %v2394, 128
        %2443 = vxpose.xlu0.b32.cont [13/16] %v2395, 128
        %2444 = vxpose.xlu0.b32.cont [14/16] %v2396, 128
        %2445 = vxpose.xlu0.b32.cont [15/16] %v2397, 128
        %2446 = vxpose.xlu0.b32.end [16/16] %v2398, 128
        %v2447 = vpop.trf.xlu0
        %v2448 = vpop.trf.xlu0
        %v2449 = vpop.trf.xlu0
        %v2450 = vpop.trf.xlu0
        %v2451 = vpop.trf.xlu0
        %v2452 = vpop.trf.xlu0
        %v2453 = vpop.trf.xlu0
        %v2454 = vpop.trf.xlu0
        %v2455 = vpop.trf.xlu0
        %v2456 = vpop.trf.xlu0
        %v2457 = vpop.trf.xlu0
        %v2458 = vpop.trf.xlu0
        %v2459 = vpop.trf.xlu0
        %v2460 = vpop.trf.xlu0
        %v2461 = vpop.trf.xlu0
        %v2462 = vpop.trf.xlu0
        %2463 = vst [vmem:[%s313] sm:$0xff] %v2415
        %2464 = vst [vmem:[%s313 + $0x8] sm:$0xff] %v2447
        %2465 = vst [vmem:[%s313 + $0x10] sm:$0xff] %v2416
        %2466 = vst [vmem:[%s313 + $0x18] sm:$0xff] %v2448
        %2467 = vst [vmem:[%s313 + $0x20] sm:$0xff] %v2417
        %2468 = vst [vmem:[%s313 + $0x28] sm:$0xff] %v2449
        %2469 = vst [vmem:[%s313 + $0x30] sm:$0xff] %v2418
        %2470 = vst [vmem:[%s313 + $0x38] sm:$0xff] %v2450
        %2471 = vst [vmem:[%s313 + $0x40] sm:$0xff] %v2419
        %2472 = vst [vmem:[%s313 + $0x48] sm:$0xff] %v2451
        %2473 = vst [vmem:[%s313 + $0x50] sm:$0xff] %v2420
        %2474 = vst [vmem:[%s313 + $0x58] sm:$0xff] %v2452
        %2475 = vst [vmem:[%s313 + $0x60] sm:$0xff] %v2421
        %2476 = vst [vmem:[%s313 + $0x68] sm:$0xff] %v2453
        %2477 = vst [vmem:[%s313 + $0x70] sm:$0xff] %v2422
        %2478 = vst [vmem:[%s313 + $0x78] sm:$0xff] %v2454
        %2479 = vst [vmem:[%s313 + $0x80] sm:$0xff] %v2423
        %2480 = vst [vmem:[%s313 + $0x88] sm:$0xff] %v2455
        %2481 = vst [vmem:[%s313 + $0x90] sm:$0xff] %v2424
        %2482 = vst [vmem:[%s313 + $0x98] sm:$0xff] %v2456
        %2483 = vst [vmem:[%s313 + $0xa0] sm:$0xff] %v2425
        %2484 = vst [vmem:[%s313 + $0xa8] sm:$0xff] %v2457
        %2485 = vst [vmem:[%s313 + $0xb0] sm:$0xff] %v2426
        %2486 = vst [vmem:[%s313 + $0xb8] sm:$0xff] %v2458
        %2487 = vst [vmem:[%s313 + $0xc0] sm:$0xff] %v2427
        %2488 = vst [vmem:[%s313 + $0xc8] sm:$0xff] %v2459
        %2489 = vst [vmem:[%s313 + $0xd0] sm:$0xff] %v2428
        %2490 = vst [vmem:[%s313 + $0xd8] sm:$0xff] %v2460
        %2491 = vst [vmem:[%s313 + $0xe0] sm:$0xff] %v2429
        %2492 = vst [vmem:[%s313 + $0xe8] sm:$0xff] %v2461
        %2493 = vst [vmem:[%s313 + $0xf0] sm:$0xff] %v2430
        %2494 = vst [vmem:[%s313 + $0xf8] sm:$0xff] %v2462
        %s2495 = sand.u32 %s164, 1
        %s2496 = scalar_lea.sflag [#allocation4], %s2495
        %s2497 = sand.u32 %s164, 1
        %s2498 = smul.addr %s2497, 256
        %s2499 = scalar_lea.vmem [#allocation10], %s2498
        // Predicated region
        $region61: #{tpu_custom_call.1} parent=43 // pred_check
          %p2500 = pneg %p174
        $region62: #{tpu_custom_call.1} parent=43 // pred_check_branch
          %2502 = sbr.rel (%p2500) target = $region64
        $region63: #{tpu_custom_call.1} parent=43 // pred_region
          %s2504 = ssub.s32 4096, 4096
          %2505 = vsyncadd %s2496, %s2504
          %s2506 = smul.addr %s25, 32
          %s2507 = smul.addr %s2506, 128
          %s2508 = scalar_lea.hbm %s6, %s2507
          %s2509 = sshll.u32 %s2499, 4
          %s2510 = int_to_ptr.vmem [resolvable:$true] %s2509
          %2515 = dma.vmem_to_hbm [thread:$0]  %s2510, 4096, %s2508, %s2496, 256, 256, 16
        $region64: #{tpu_custom_call.1} parent=43 // pred_fallthru
          _
      $region44: #{tpu_custom_call.1} parent=5 // pred_fallthru
        _
      %p2516 = scmp.le.s32.totalorder 2, %s20
      // Predicated region
      $region65: #{tpu_custom_call.1} parent=5 // pred_check
        %p2517 = pneg %p2516
      $region66: #{tpu_custom_call.1} parent=5 // pred_check_branch
        %2519 = sbr.rel (%p2517) target = $region68
      $region67: #{tpu_custom_call.1} parent=5 // pred_region
        %s2520 = ssub.s32 %s20, 2
        // Predicated region
        $region69: #{tpu_custom_call.1} parent=67 // pred_check
          %p2521 = pneg %p180
        $region70: #{tpu_custom_call.1} parent=67 // pred_check_branch
          %2523 = sbr.rel (%p2521) target = $region72
        $region71: #{tpu_custom_call.1} parent=67 // pred_region
          %s2524 = sand.u32 %s165, 1
          %s2525 = scalar_lea.sflag [#allocation4], %s2524
          %s2526 = sand.u32 %s165, 1
          %s2527 = smul.addr %s2526, 256
          %s2528 = scalar_lea.vmem [#allocation10], %s2527
          %2529 = dma.done %s2525, 4096
        $region72: #{tpu_custom_call.1} parent=67 // pred_fallthru
          _
      $region68: #{tpu_custom_call.1} parent=5 // pred_fallthru
        _
    $region6: #{tpu_custom_call.1} parent=1 // loop_footer
      %s24 = sadd.s32 1, %s20
    $region7: #{tpu_custom_call.1} parent=1 // loop_footer_branch
      %19 = sbr.rel target = $region3
    $region8: #{tpu_custom_call.1} parent=1 // loop_exit
      _
    %2530 = vsyncpa [#allocation3], 1
    %s2531 = scalar_lea.sflag [#allocation3], 1
    %2532 = vsyncpa %s2531, 1
    %2533 = vsyncpa [#allocation6], 1
    %2534 = vsyncpa [#allocation9], 1
    %2535 = vsyncpa [#allocation4], 1
    %s2536 = scalar_lea.sflag [#allocation4], 1
    %2537 = vsyncpa %s2536, 1

</llo_original>
